<compile_context>
chip_gen: v7x
topology: tpu7x:2x2x1
jax: 0.10.0
libtpu: 0.0.40
codegen_flags: <defaults>
</compile_context>

<pallas_src>
import numpy as np
import jax
import jax.numpy as jnp
from jax.experimental import pallas as pl
from jax.experimental.pallas import tpu as pltpu


def _round_up(x, m):
    return ((x + m - 1) // m) * m


def _vmem_capacity_bytes():
    # 128 MiB on v5e/v6e, 64 MiB per TensorCore on v7x.  Conservative fallback
    # if the query is unavailable.
    try:
        return int(pltpu.get_tpu_info().vmem_capacity_bytes)
    except Exception:
        return 64 * 1024 * 1024


def rffn_kernel(x_ref, coeff_t_ref, offset_ref, w2_t_ref, out_ref, acc_ref):
    k = pl.program_id(1)

    @pl.when(k == 0)
    def _init():
        acc_ref[...] = jnp.zeros_like(acc_ref)

    # (TM, in_dim) @ (in_dim, TKF) on the MXU, f32 accumulate.
    h = jnp.dot(x_ref[...], coeff_t_ref[...],
                preferred_element_type=jnp.float32)
    # Phase add (VPU) + cosine (EUP).  The kernel is transcendental-bound at
    # realistic shapes, so the broadcast add hides under the cos; folding the
    # offset into the first matmul would need a host-side ones-column concat on
    # x (an extra HBM round trip of x), so it is intentionally not done.
    h = jnp.cos(h + offset_ref[...])
    # (TM, TKF) @ (TKF, out_dim) accumulated over the feature axis.
    acc_ref[...] += jnp.dot(h, w2_t_ref[...],
                            preferred_element_type=jnp.float32)

    @pl.when(k == pl.num_programs(1) - 1)
    def _finalize():
        out_ref[...] = acc_ref[...].astype(out_ref.dtype)


def rffn_forward(x, coeff, offset, w2, *, tm=None, tkf=None,
                 vmem_limit_bytes=None):
    """x: (N, in_dim); coeff: (nfeat, in_dim); offset: (1, nfeat); w2: (out_dim, nfeat)."""
    squeeze = (x.ndim == 1)
    if squeeze:                      # mirror LinearClamped's 1-D handling
        x = x[None, :]
    n, in_dim = x.shape
    nfeat = coeff.shape[0]
    out_dim = w2.shape[0]

    vmem = _vmem_capacity_bytes()

    # ---- feature-axis tile (reduction axis) -------------------------------
    TKF_CAP = 2048                                   # multiple of 128
    if tkf is None:
        tkf = nfeat if nfeat <= TKF_CAP else _round_up(
            pl.cdiv(nfeat, pl.cdiv(nfeat, TKF_CAP)), 128)
    tkf = max(1, min(int(tkf), nfeat))
    if tkf < nfeat:
        tkf = _round_up(tkf, 128)                    # lane-aligned chunks
    kf_steps = pl.cdiv(nfeat, tkf)
    if kf_steps == 1:
        tkf = nfeat                                  # full-dim block, no padding
    nfeat_pad = tkf * kf_steps

    coeff_t = coeff.T                                # (in_dim, nfeat)
    w2_t = w2.T                                      # (nfeat, out_dim)
    offset_p = offset.reshape(1, -1)                 # (1, nfeat)
    if nfeat_pad != nfeat:
        # Zero-pad the feature axis so every feature block is full.  w2_t's
        # padded rows are exactly zero, so padded features contribute 0
        # (cos(0+0)=1 times 0) -- no garbage ever enters the accumulator.
        pad = nfeat_pad - nfeat
        coeff_t = jnp.pad(coeff_t, ((0, 0), (0, pad)))
        offset_p = jnp.pad(offset_p, ((0, 0), (0, pad)))
        w2_t = jnp.pad(w2_t, ((0, pad), (0, 0)))

    # ---- batch tile (parallel axis) ----------------------------------------
    if tm is None:
        # Budget the f32 (TM, TKF) intermediate + its cosine at ~25% of
        # per-core VMEM: 2 * TM*TKF*4 <= vmem/4.
        tm = vmem // (32 * tkf)
        tm = max(8, min(32768, (tm // 8) * 8))
    tm = max(8, (min(int(tm), _round_up(n, 8)) // 8) * 8)

    # Keep the batch-grid length even so v7x's two TensorCores stay balanced
    # ("parallel" axis is sharded across cores); harmless on 1-TC v5e/v6e.
    steps = pl.cdiv(n, tm)
    if steps > 1 and steps % 2 == 1:
        tm = max(8, _round_up(pl.cdiv(n, steps + 1), 8))
        steps = pl.cdiv(n, tm)

    if vmem_limit_bytes is None:
        vmem_limit_bytes = (100 * 1024 * 1024 if vmem >= 100 * 1024 * 1024
                            else min(vmem - 8 * 1024 * 1024, 56 * 1024 * 1024))

    weight_bytes = 4 * (in_dim + 1 + out_dim) * nfeat_pad * (
        1 if kf_steps == 1 else steps)
    cost = pl.CostEstimate(
        flops=2 * n * nfeat_pad * (in_dim + out_dim),
        transcendentals=n * nfeat_pad,
        bytes_accessed=4 * n * (in_dim + out_dim) + weight_bytes,
    )

    grid_spec = pltpu.PrefetchScalarGridSpec(
        num_scalar_prefetch=0,
        grid=(steps, kf_steps),
        in_specs=[
            # x: streamed over the batch axis, reused across feature chunks.
            pl.BlockSpec((tm, in_dim), lambda i, k: (i, 0)),
            # Weights: constant over the batch axis; with kf_steps == 1 their
            # block index never changes -> DMA'd once, VMEM-resident.
            pl.BlockSpec((in_dim, tkf), lambda i, k: (0, k)),
            pl.BlockSpec((1, tkf), lambda i, k: (0, k)),
            pl.BlockSpec((tkf, out_dim), lambda i, k: (k, 0)),
        ],
        out_specs=pl.BlockSpec((tm, out_dim), lambda i, k: (i, 0)),
        scratch_shapes=[pltpu.VMEM((tm, out_dim), jnp.float32)],
    )

    out = pl.pallas_call(
        rffn_kernel,
        out_shape=jax.ShapeDtypeStruct((n, out_dim), x.dtype),
        grid_spec=grid_spec,
        compiler_params=pltpu.CompilerParams(
            dimension_semantics=("parallel", "arbitrary"),
            vmem_limit_bytes=int(vmem_limit_bytes),
        ),
        cost_estimate=cost,
    )(x, coeff_t, offset_p, w2_t)

    return out[0] if squeeze else out


def rffn_reference(x, coeff, offset, w2):
    """Pure-JAX reference matching the PyTorch forward."""
    return jnp.cos(x @ coeff.T + offset) @ w2.T


if __name__ == "__main__":
    in_dim, out_dim, sigma = 4, 4, 10.0
    n = 300   # deliberately not a multiple of the tile: exercises boundary masking

    key = jax.random.PRNGKey(0)
    k_c1, k_o1, k_w1, k_x, k_c2, k_o2, k_w2 = jax.random.split(key, 7)

    def make_params(nfeat, kc, ko, kw):
        sigma_vec = jnp.ones((in_dim,), jnp.float32) * sigma
        coeff = jax.random.normal(kc, (nfeat, in_dim), jnp.float32) / sigma_vec[None, :]
        offset = 2.0 * jnp.pi * jax.random.uniform(ko, (1, nfeat), jnp.float32)
        bound = 1.0 / np.sqrt(nfeat)
        w2 = jax.random.uniform(kw, (out_dim, nfeat), jnp.float32,
                                minval=-bound, maxval=bound)
        return coeff, offset, w2

    x = jax.random.normal(k_x, (n, in_dim), jnp.float32)

    # --- nfeat=128: single feature step, VMEM-resident weights --------------
    coeff, offset, w2 = make_params(128, k_c1, k_o1, k_w1)
    y_ref = rffn_reference(x, coeff, offset, w2)

    # Multi-step batch grid with a partial last block (tm hint 128 -> even grid).
    y = jax.block_until_ready(rffn_forward(x, coeff, offset, w2, tm=128))
    np.testing.assert_allclose(np.asarray(y), np.asarray(y_ref),
                               rtol=1e-5, atol=1e-5)

    # Default generation-aware tile sizing (single step at this toy size).
    y2 = jax.block_until_ready(rffn_forward(x, coeff, offset, w2))
    np.testing.assert_allclose(np.asarray(y2), np.asarray(y_ref),
                               rtol=1e-5, atol=1e-5)

    # --- nfeat=320, tkf=128: multi-step feature reduction + zero-padded tail --
    coeff2, offset2, w22 = make_params(320, k_c2, k_o2, k_w2)
    y3_ref = rffn_reference(x, coeff2, offset2, w22)
    y3 = jax.block_until_ready(
        rffn_forward(x, coeff2, offset2, w22, tm=128, tkf=128))
    np.testing.assert_allclose(np.asarray(y3), np.asarray(y3_ref),
                               rtol=1e-5, atol=1e-5)

    print("KERNEL_OK")
</pallas_src>

<mosaic_0001>
module attributes {stable_mosaic.version = 11 : i64} {
  func.func @rffn_kernel(%arg0: i32, %arg1: i32, %arg2: memref<80x4xf32, #tpu.memory_space<vmem>>, %arg3: memref<4x128xf32, #tpu.memory_space<vmem>>, %arg4: memref<1x128xf32, #tpu.memory_space<vmem>>, %arg5: memref<128x4xf32, #tpu.memory_space<vmem>>, %arg6: memref<80x4xf32, #tpu.memory_space<vmem>>, %arg7: memref<80x4xf32, #tpu.memory_space<vmem>>) attributes {dimension_semantics = [#tpu.dimension_semantics<parallel>, #tpu.dimension_semantics<arbitrary>], iteration_bounds = array<i64: 4, 1>, scalar_prefetch = 0 : i64, scratch_operands = 1 : i64, tpu.core_type = #tpu.core_type<tc>, window_params = [{transform_indices = @transform_0, window_bounds = array<i64: 80, 4>}, {transform_indices = @transform_1, window_bounds = array<i64: 4, 128>}, {transform_indices = @transform_2, window_bounds = array<i64: 1, 128>}, {transform_indices = @transform_3, window_bounds = array<i64: 128, 4>}, {transform_indices = @transform_4, window_bounds = array<i64: 80, 4>}]} {
    %c0_i32 = arith.constant 0 : i32
    %0 = arith.cmpi eq, %arg1, %c0_i32 : i32
    %1 = arith.extui %0 : i1 to i32
    %c0_i32_0 = arith.constant 0 : i32
    %2 = arith.cmpi ne, %1, %c0_i32_0 : i32
    scf.if %2 {
      %cst_15 = arith.constant 0.000000e+00 : f32
      %18 = vector.broadcast %cst_15 : f32 to vector<80x4xf32>
      %c0_16 = arith.constant 0 : index
      %c0_17 = arith.constant 0 : index
      %19 = vector.load %arg7[%c0_16, %c0_17] : memref<80x4xf32, #tpu.memory_space<vmem>>, vector<80x4xf32>
      tpu.vector_store %arg7[%c0_16, %c0_17], %18 {strides = array<i32>} : memref<80x4xf32, #tpu.memory_space<vmem>>, vector<80x4xf32>,
    } else {
    }
    %c0 = arith.constant 0 : index
    %c0_1 = arith.constant 0 : index
    %3 = vector.load %arg2[%c0, %c0_1] : memref<80x4xf32, #tpu.memory_space<vmem>>, vector<80x4xf32>
    %c0_2 = arith.constant 0 : index
    %c0_3 = arith.constant 0 : index
    %4 = vector.load %arg3[%c0_2, %c0_3] : memref<4x128xf32, #tpu.memory_space<vmem>>, vector<4x128xf32>
    %cst = arith.constant dense<0.000000e+00> : vector<80x128xf32>
    %5 = tpu.matmul %3, %4, %cst {dimension_numbers = #tpu.dot_dimension_numbers<[1], [0], [0], [1], [0, 0, 1, 1], [], []>} : vector<80x4xf32>, vector<4x128xf32>, vector<80x128xf32> -> vector<80x128xf32>
    %c0_4 = arith.constant 0 : index
    %c0_5 = arith.constant 0 : index
    %6 = vector.load %arg4[%c0_4, %c0_5] : memref<1x128xf32, #tpu.memory_space<vmem>>, vector<1x128xf32>
    %7 = vector.broadcast %6 : vector<1x128xf32> to vector<80x128xf32>
    %8 = arith.addf %5, %7 : vector<80x128xf32>
    %9 = math.cos %8 : vector<80x128xf32>
    %c0_6 = arith.constant 0 : index
    %c0_7 = arith.constant 0 : index
    %10 = vector.load %arg7[%c0_6, %c0_7] : memref<80x4xf32, #tpu.memory_space<vmem>>, vector<80x4xf32>
    %c0_8 = arith.constant 0 : index
    %c0_9 = arith.constant 0 : index
    %11 = vector.load %arg5[%c0_8, %c0_9] : memref<128x4xf32, #tpu.memory_space<vmem>>, vector<128x4xf32>
    %cst_10 = arith.constant dense<0.000000e+00> : vector<80x4xf32>
    %12 = tpu.matmul %9, %11, %cst_10 {dimension_numbers = #tpu.dot_dimension_numbers<[1], [0], [0], [1], [0, 0, 1, 1], [], []>} : vector<80x128xf32>, vector<128x4xf32>, vector<80x4xf32> -> vector<80x4xf32>
    %13 = arith.addf %10, %12 : vector<80x4xf32>
    %c0_11 = arith.constant 0 : index
    %c0_12 = arith.constant 0 : index
    %14 = vector.load %arg7[%c0_11, %c0_12] : memref<80x4xf32, #tpu.memory_space<vmem>>, vector<80x4xf32>
    tpu.vector_store %arg7[%c0_11, %c0_12], %13 {strides = array<i32>} : memref<80x4xf32, #tpu.memory_space<vmem>>, vector<80x4xf32>,
    %c0_i32_13 = arith.constant 0 : i32
    %15 = arith.cmpi eq, %arg1, %c0_i32_13 : i32
    %16 = arith.extui %15 : i1 to i32
    %c0_i32_14 = arith.constant 0 : i32
    %17 = arith.cmpi ne, %16, %c0_i32_14 : i32
    scf.if %17 {
      %c0_15 = arith.constant 0 : index
      %c0_16 = arith.constant 0 : index
      %18 = vector.load %arg7[%c0_15, %c0_16] : memref<80x4xf32, #tpu.memory_space<vmem>>, vector<80x4xf32>
      %c0_17 = arith.constant 0 : index
      %c0_18 = arith.constant 0 : index
      %19 = vector.load %arg6[%c0_17, %c0_18] : memref<80x4xf32, #tpu.memory_space<vmem>>, vector<80x4xf32>
      tpu.vector_store %arg6[%c0_17, %c0_18], %18 {strides = array<i32>} : memref<80x4xf32, #tpu.memory_space<vmem>>, vector<80x4xf32>,
    } else {
    }
    return
  }
  func.func @transform_0(%arg0: i32, %arg1: i32) -> (i32, i32) {
    %c0_i32 = arith.constant 0 : i32
    %c0_i32_0 = arith.constant 0 : i32
    return %arg0, %c0_i32 : i32, i32
  }
  func.func @transform_1(%arg0: i32, %arg1: i32) -> (i32, i32) {
    %c0_i32 = arith.constant 0 : i32
    %c0_i32_0 = arith.constant 0 : i32
    return %c0_i32, %arg1 : i32, i32
  }
  func.func @transform_2(%arg0: i32, %arg1: i32) -> (i32, i32) {
    %c0_i32 = arith.constant 0 : i32
    %c0_i32_0 = arith.constant 0 : i32
    return %c0_i32, %arg1 : i32, i32
  }
  func.func @transform_3(%arg0: i32, %arg1: i32) -> (i32, i32) {
    %c0_i32 = arith.constant 0 : i32
    %c0_i32_0 = arith.constant 0 : i32
    return %arg1, %c0_i32 : i32, i32
  }
  func.func @transform_4(%arg0: i32, %arg1: i32) -> (i32, i32) {
    %c0_i32 = arith.constant 0 : i32
    %c0_i32_0 = arith.constant 0 : i32
    return %arg0, %c0_i32 : i32, i32
  }
}

</mosaic_0001>

<llo_original>
// kernel: tpu_custom_call.1
$region0: #{tpu_custom_call.1}
  #allocation0 [shape = 'u32[]', space=smem, size = 0x4, offset = 0x4, fixed_abs, tag = 'smem constant byte address 0x4 - core index']
  #allocation1 [shape = 'u32[144,128]{1,0:T(1,128)}', space=vmem, size = 0x12000, scoped, tag = 'internal scratch']
  #allocation2 [shape = 'f32[80,4]{1,0:T(8,128)}', space=vmem, size = 0xa000, scoped, tag = 'scratch operand']
  %s0 = inlined_call_operand.vmem [shape: f32[300,4], index: 0, kind: input, shape index: {}]
  %s1 = inlined_call_operand.vmem [shape: f32[4,128], index: 1, kind: input, shape index: {}]
  %s2 = inlined_call_operand.vmem [shape: f32[1,128], index: 2, kind: input, shape index: {}]
  %s3 = inlined_call_operand.vmem [shape: f32[128,4], index: 3, kind: input, shape index: {}]
  %s4 = inlined_call_operand.vmem [shape: f32[300,4], index: 4, kind: output, shape index: {}]
  %s5 = sld [smem:[#allocation0]]
  $region105: #{tpu_custom_call.1} parent=0
    _
  %s7 = ssub.s32 1, %s5
  %s8 = scalar_select 0, %s7, %s5
  $region1: #{tpu_custom_call.1} parent=0
    #allocation3 [shape = 'u8[81920]{0}', space=vmem, size = 0x14000, scoped, tag = 'output window, operand 0']
    loop: start=0, step=1, limit=6
    $region2: #{tpu_custom_call.1} parent=1 // loop_pre_header
      _
    $region3: #{tpu_custom_call.1} parent=1 // loop_header
      %s10 = sphi 0, %s14
      %p11 = scmp.ge.s32.totalorder %s10, 6
      %s17 = sphi 0, %s29
      %s18 = sphi 0, %s25
      %s19 = sphi 0, %s17
      %s20 = sphi 0, %s18
      %s21 = sphi 0, %s19
      %s22 = sphi 0, %s20
      %s32 = sphi 0, %s34
      %s35 = sphi 0, %s32
      %s36 = sphi 0, %s35
      %s52 = sphi 0, %s36
      %s58 = sphi 0, %s60
      %s61 = sphi 0, %s58
      %s62 = sphi 0, %s61
      %s78 = sphi 0, %s62
      %s84 = sphi 0, %s86
      %s87 = sphi 0, %s84
      %s88 = sphi 0, %s87
      %s104 = sphi 0, %s88
      %s110 = sphi 0, %s112
      %s113 = sphi 0, %s110
      %s114 = sphi 0, %s113
      %s130 = sphi 0, %s114
      %s136 = sphi 0, %s138
      %s139 = sphi 0, %s136
      %s140 = sphi 0, %s139
      %s156 = sphi 0, %s140
    $region4: #{tpu_custom_call.1} parent=1 // loop_header_branch
      %13 = sbr.rel (%p11) target = $region8
    $region5: #{tpu_custom_call.1} parent=1 // loop_body
      %s15 = ssub.s32 %s10, 1
      %s16 = ssub.s32 %s10, 2
      %s23 = sadd.s32 1, %s18
      %p24 = scmp.ge.s32.totalorder %s23, 1
      %s25 = scalar_select %p24, 0, %s23
      %s26 = sadd.s32 1, %s17
      %s27 = scalar_select %p24, %s26, %s17
      %p28 = scmp.ge.s32.totalorder %s27, 4
      %s29 = scalar_select %p28, 0, %s27
      %s30 = ssub.s32 %s17, %s29
      %p31 = scmp.eq.s32.totalorder %s30, 0
      %s33 = sadd.s32 %s32, 1
      %s34 = scalar_select %p31, %s32, %s33
      %p37 = pneg %p31
      %p38 = scmp.eq.s32.totalorder %s10, 3
      %p39 = por %p37, %p38
      %p40 = scmp.ne.s32.totalorder %s32, %s35
      %p41 = scmp.eq.s32.totalorder %s10, 0
      %p42 = por %p40, %p41
      %p43 = scmp.ne.s32.totalorder %s32, %s35
      %p44 = scmp.eq.s32.totalorder %s15, 3
      %p45 = por %p43, %p44
      %p46 = scmp.ne.s32.totalorder %s35, %s36
      %p47 = scmp.eq.s32.totalorder %s15, 0
      %p48 = por %p46, %p47
      %p49 = scmp.ne.s32.totalorder %s35, %s36
      %p50 = scmp.eq.s32.totalorder %s16, 3
      %p51 = por %p49, %p50
      %p53 = scmp.ne.s32.totalorder %s36, %s52
      %p54 = scmp.eq.s32.totalorder %s16, 0
      %p55 = por %p53, %p54
      %s56 = ssub.s32 %s18, %s25
      %p57 = scmp.eq.s32.totalorder %s56, 0
      %s59 = sadd.s32 %s58, 1
      %s60 = scalar_select %p57, %s58, %s59
      %p63 = pneg %p57
      %p64 = scmp.eq.s32.totalorder %s10, 3
      %p65 = por %p63, %p64
      %p66 = scmp.ne.s32.totalorder %s58, %s61
      %p67 = scmp.eq.s32.totalorder %s10, 0
      %p68 = por %p66, %p67
      %p69 = scmp.ne.s32.totalorder %s58, %s61
      %p70 = scmp.eq.s32.totalorder %s15, 3
      %p71 = por %p69, %p70
      %p72 = scmp.ne.s32.totalorder %s61, %s62
      %p73 = scmp.eq.s32.totalorder %s15, 0
      %p74 = por %p72, %p73
      %p75 = scmp.ne.s32.totalorder %s61, %s62
      %p76 = scmp.eq.s32.totalorder %s16, 3
      %p77 = por %p75, %p76
      %p79 = scmp.ne.s32.totalorder %s62, %s78
      %p80 = scmp.eq.s32.totalorder %s16, 0
      %p81 = por %p79, %p80
      %s82 = ssub.s32 %s18, %s25
      %p83 = scmp.eq.s32.totalorder %s82, 0
      %s85 = sadd.s32 %s84, 1
      %s86 = scalar_select %p83, %s84, %s85
      %p89 = pneg %p83
      %p90 = scmp.eq.s32.totalorder %s10, 3
      %p91 = por %p89, %p90
      %p92 = scmp.ne.s32.totalorder %s84, %s87
      %p93 = scmp.eq.s32.totalorder %s10, 0
      %p94 = por %p92, %p93
      %p95 = scmp.ne.s32.totalorder %s84, %s87
      %p96 = scmp.eq.s32.totalorder %s15, 3
      %p97 = por %p95, %p96
      %p98 = scmp.ne.s32.totalorder %s87, %s88
      %p99 = scmp.eq.s32.totalorder %s15, 0
      %p100 = por %p98, %p99
      %p101 = scmp.ne.s32.totalorder %s87, %s88
      %p102 = scmp.eq.s32.totalorder %s16, 3
      %p103 = por %p101, %p102
      %p105 = scmp.ne.s32.totalorder %s88, %s104
      %p106 = scmp.eq.s32.totalorder %s16, 0
      %p107 = por %p105, %p106
      %s108 = ssub.s32 %s18, %s25
      %p109 = scmp.eq.s32.totalorder %s108, 0
      %s111 = sadd.s32 %s110, 1
      %s112 = scalar_select %p109, %s110, %s111
      %p115 = pneg %p109
      %p116 = scmp.eq.s32.totalorder %s10, 3
      %p117 = por %p115, %p116
      %p118 = scmp.ne.s32.totalorder %s110, %s113
      %p119 = scmp.eq.s32.totalorder %s10, 0
      %p120 = por %p118, %p119
      %p121 = scmp.ne.s32.totalorder %s110, %s113
      %p122 = scmp.eq.s32.totalorder %s15, 3
      %p123 = por %p121, %p122
      %p124 = scmp.ne.s32.totalorder %s113, %s114
      %p125 = scmp.eq.s32.totalorder %s15, 0
      %p126 = por %p124, %p125
      %p127 = scmp.ne.s32.totalorder %s113, %s114
      %p128 = scmp.eq.s32.totalorder %s16, 3
      %p129 = por %p127, %p128
      %p131 = scmp.ne.s32.totalorder %s114, %s130
      %p132 = scmp.eq.s32.totalorder %s16, 0
      %p133 = por %p131, %p132
      %s134 = ssub.s32 %s17, %s29
      %p135 = scmp.eq.s32.totalorder %s134, 0
      %s137 = sadd.s32 %s136, 1
      %s138 = scalar_select %p135, %s136, %s137
      %p141 = pneg %p135
      %p142 = scmp.eq.s32.totalorder %s10, 3
      %p143 = por %p141, %p142
      %p144 = scmp.ne.s32.totalorder %s136, %s139
      %p145 = scmp.eq.s32.totalorder %s10, 0
      %p146 = por %p144, %p145
      %p147 = scmp.ne.s32.totalorder %s136, %s139
      %p148 = scmp.eq.s32.totalorder %s15, 3
      %p149 = por %p147, %p148
      %p150 = scmp.ne.s32.totalorder %s139, %s140
      %p151 = scmp.eq.s32.totalorder %s15, 0
      %p152 = por %p150, %p151
      %p153 = scmp.ne.s32.totalorder %s139, %s140
      %p154 = scmp.eq.s32.totalorder %s16, 3
      %p155 = por %p153, %p154
      %p157 = scmp.ne.s32.totalorder %s140, %s156
      %p158 = scmp.eq.s32.totalorder %s16, 0
      %p159 = por %p157, %p158
      %p160 = scmp.le.s32.totalorder 1, %s10
      %p161 = scmp.lt.s32.totalorder %s10, 5
      %p162 = pnand %p160, %p161
      %p163 = pneg %p162
      // Predicated region
      $region9: #{tpu_custom_call.1} parent=5 // pred_check
        _
      $region10: #{tpu_custom_call.1} parent=5 // pred_check_branch
        %165 = sbr.rel (%p162) target = $region12
      $region11: #{tpu_custom_call.1} parent=5 // pred_region
        %s166 = ssub.s32 %s10, 1
        // Predicated region
        $region13: #{tpu_custom_call.1} parent=11 // pred_check
          %p167 = pneg %p74
        $region14: #{tpu_custom_call.1} parent=11 // pred_check_branch
          %169 = sbr.rel (%p167) target = $region16
        $region15: #{tpu_custom_call.1} parent=11 // pred_region
          %p170 = scmp.lt.s32.totalorder %s20, 0
          %s171 = scalar_select %p170, %s20, 0
          %s172 = smul.addr %s171, 4
          %s173 = scalar_lea.vmem %s1, %s172
        $region16: #{tpu_custom_call.1} parent=11 // pred_fallthru
          _
        // Predicated region
        $region17: #{tpu_custom_call.1} parent=11 // pred_check
          %p174 = pneg %p100
        $region18: #{tpu_custom_call.1} parent=11 // pred_check_branch
          %176 = sbr.rel (%p174) target = $region20
        $region19: #{tpu_custom_call.1} parent=11 // pred_region
          %p177 = scmp.lt.s32.totalorder %s20, 0
          %s178 = scalar_select %p177, %s20, 0
          %s179 = scalar_lea.vmem %s2, %s178
        $region20: #{tpu_custom_call.1} parent=11 // pred_fallthru
          _
        // Predicated region
        $region21: #{tpu_custom_call.1} parent=11 // pred_check
          %p180 = pneg %p126
        $region22: #{tpu_custom_call.1} parent=11 // pred_check_branch
          %182 = sbr.rel (%p180) target = $region24
        $region23: #{tpu_custom_call.1} parent=11 // pred_region
          %s183 = smul.u32 16, %s20
          %p184 = scmp.lt.s32.totalorder %s183, 15
          %s185 = scalar_select %p184, %s183, 15
          %s186 = smul.addr %s185, 8
          %s187 = scalar_lea.vmem %s3, %s186
          %s188 = smul.u32 16, %s20
        $region24: #{tpu_custom_call.1} parent=11 // pred_fallthru
          _
      $region12: #{tpu_custom_call.1} parent=5 // pred_fallthru
        _
      %p189 = scmp.lt.s32.totalorder %s10, 4
      // Predicated region
      $region25: #{tpu_custom_call.1} parent=5 // pred_check
        %p190 = pneg %p189
      $region26: #{tpu_custom_call.1} parent=5 // pred_check_branch
        %192 = sbr.rel (%p190) target = $region28
      $region27: #{tpu_custom_call.1} parent=5 // pred_region
        // Predicated region
        $region29: #{tpu_custom_call.1} parent=27 // pred_check
          %p193 = pneg %p42
        $region30: #{tpu_custom_call.1} parent=27 // pred_check_branch
          %195 = sbr.rel (%p193) target = $region32
        $region31: #{tpu_custom_call.1} parent=27 // pred_region
          %s196 = smul.u32 10, %s17
          %s197 = ssub.s32 38, %s196
          %p198 = scmp.lt.s32.totalorder %s197, 10
          %s199 = scalar_select %p198, %s197, 10
          %s200 = smul.u32 128, %s199
          %p201 = scmp.lt.s32.totalorder %s196, 37
          %s202 = scalar_select %p201, %s196, 37
          %s203 = smul.addr %s202, 8
          %s204 = scalar_lea.vmem %s0, %s203
          %s205 = smul.u32 10, %s17
          %s206 = ssub.s32 38, %s205
          %p207 = scmp.lt.s32.totalorder %s206, 10
          %s208 = scalar_select %p207, %s206, 10
          %s209 = smul.u32 128, %s208
        $region32: #{tpu_custom_call.1} parent=27 // pred_fallthru
          _
      $region28: #{tpu_custom_call.1} parent=5 // pred_fallthru
        _
      %p210 = scmp.le.s32.totalorder 1, %s10
      %p211 = scmp.lt.s32.totalorder %s10, 5
      %p212 = pnand %p210, %p211
      %p213 = pneg %p212
      // Predicated region
      $region33: #{tpu_custom_call.1} parent=5 // pred_check
        _
      $region34: #{tpu_custom_call.1} parent=5 // pred_check_branch
        %215 = sbr.rel (%p212) target = $region36
      $region35: #{tpu_custom_call.1} parent=5 // pred_region
        %s216 = ssub.s32 %s10, 1
        %s217 = smul.u32 10, %s19
        %s218 = ssub.s32 38, %s217
        %p219 = scmp.lt.s32.totalorder %s218, 10
        %s220 = scalar_select %p219, %s218, 10
        %s221 = smul.u32 128, %s220
        %p222 = scmp.lt.s32.totalorder %s217, 37
        %s223 = scalar_select %p222, %s217, 37
        %s224 = smul.addr %s223, 8
        %s225 = scalar_lea.vmem %s0, %s224
        %p226 = pneg %p48
        %p227 = pneg %p45
        %p228 = scmp.lt.s32.totalorder %s20, 0
        %s229 = scalar_select %p228, %s20, 0
        %s230 = smul.addr %s229, 4
        %s231 = scalar_lea.vmem %s1, %s230
        %p232 = pneg %p74
        %p233 = pneg %p71
        %p234 = scmp.lt.s32.totalorder %s20, 0
        %s235 = scalar_select %p234, %s20, 0
        %s236 = scalar_lea.vmem %s2, %s235
        %p237 = pneg %p100
        %p238 = pneg %p97
        %s239 = smul.u32 16, %s20
        %p240 = scmp.lt.s32.totalorder %s239, 15
        %s241 = scalar_select %p240, %s239, 15
        %s242 = smul.addr %s241, 8
        %s243 = scalar_lea.vmem %s3, %s242
        %p244 = pneg %p126
        %p245 = pneg %p123
        %p246 = pneg %p152
        %p247 = pneg %p149
        %s248 = sand.u32 %s139, 1
        %s249 = sand.u32 %s139, 1
        %s250 = smul.addr %s249, 80
        %s251 = scalar_lea.vmem [#allocation3], %s250
        %s252 = smul.u32 10, %s19
        %s253 = ssub.s32 38, %s252
        %p254 = scmp.lt.s32.totalorder %s253, 10
        %s255 = scalar_select %p254, %s253, 10
        %s256 = smul.u32 128, %s255
        %p257 = scmp.lt.s32.totalorder %s252, 37
        %s258 = scalar_select %p257, %s252, 37
        %s259 = smul.addr %s258, 8
        %s260 = scalar_lea.vmem %s0, %s259
        %s261 = smul.u32 10, %s19
        %s262 = ssub.s32 38, %s261
        %p263 = scmp.lt.s32.totalorder %s262, 10
        %s264 = scalar_select %p263, %s262, 10
        %s265 = smul.u32 128, %s264
        %p266 = scmp.lt.s32.totalorder %s20, 0
        %s267 = scalar_select %p266, %s20, 0
        %s268 = smul.addr %s267, 4
        %s269 = scalar_lea.vmem %s1, %s268
        %p270 = scmp.lt.s32.totalorder %s20, 0
        %s271 = scalar_select %p270, %s20, 0
        %s272 = scalar_lea.vmem %s2, %s271
        %s273 = smul.u32 16, %s20
        %p274 = scmp.lt.s32.totalorder %s273, 15
        %s275 = scalar_select %p274, %s273, 15
        %s276 = smul.addr %s275, 8
        %s277 = scalar_lea.vmem %s3, %s276
        %s278 = smul.u32 16, %s20
        %s279 = smul.u32 10, %s19
        %s280 = ssub.s32 38, %s279
        %p281 = scmp.lt.s32.totalorder %s280, 10
        %s282 = scalar_select %p281, %s280, 10
        %s283 = smul.u32 128, %s282
        %p284 = scmp.eq.s32.totalorder %s20, 0
        // Predicated region
        $region37: #{tpu_custom_call.1} parent=35 // pred_check
          %p285 = pneg %p284
        $region38: #{tpu_custom_call.1} parent=35 // pred_check_branch
          %287 = sbr.rel (%p285) target = $region40
        $region39: #{tpu_custom_call.1} parent=35 // pred_region
          %vm288 = vcmask 31744
          %289 = vst.msk [vmem:[#allocation2] sm:$0xff] %vm288, 0.0
          %290 = vst.msk [vmem:[#allocation2 + $0x8] sm:$0xff] %vm288, 0.0
          %291 = vst.msk [vmem:[#allocation2 + $0x10] sm:$0xff] %vm288, 0.0
          %292 = vst.msk [vmem:[#allocation2 + $0x18] sm:$0xff] %vm288, 0.0
          %293 = vst.msk [vmem:[#allocation2 + $0x20] sm:$0xff] %vm288, 0.0
          %294 = vst.msk [vmem:[#allocation2 + $0x28] sm:$0xff] %vm288, 0.0
          %295 = vst.msk [vmem:[#allocation2 + $0x30] sm:$0xff] %vm288, 0.0
          %296 = vst.msk [vmem:[#allocation2 + $0x38] sm:$0xff] %vm288, 0.0
          %297 = vst.msk [vmem:[#allocation2 + $0x40] sm:$0xff] %vm288, 0.0
          %298 = vst.msk [vmem:[#allocation2 + $0x48] sm:$0xff] %vm288, 0.0
        $region40: #{tpu_custom_call.1} parent=35 // pred_fallthru
          _
        %v299 = vld [vmem:[%s260] sm:$0xff]
        %v300 = vld [vmem:[%s260 + $0x8] sm:$0xff]
        %v301 = vld [vmem:[%s260 + $0x10] sm:$0xff]
        %v302 = vld [vmem:[%s260 + $0x18] sm:$0xff]
        %v303 = vld [vmem:[%s260 + $0x20] sm:$0xff]
        %v304 = vld [vmem:[%s260 + $0x28] sm:$0xff]
        %v305 = vld [vmem:[%s260 + $0x30] sm:$0xff]
        %v306 = vld [vmem:[%s260 + $0x38] sm:$0xff]
        %v307 = vld [vmem:[%s260 + $0x40] sm:$0xff]
        %v308 = vld [vmem:[%s260 + $0x48] sm:$0xff]
        %v309 = vld [vmem:[%s269] sm:$0xf]
        %v310 = vld [vmem:[%s272] sm:$0x1]
        %v312 = vlaneseq
        %v313 = vshrl.u32 %v312, 7
        %v314 = vsub.s32 0, %v313
        %v315 = vrot.slane %v310, %v314
        %vm317 = vcmask 31744
        %v319 = vsel %vm317, %v299, 0
        %v322 = vsel %vm317, %v300, 0
        %v325 = vsel %vm317, %v301, 0
        %v328 = vsel %vm317, %v302, 0
        %v331 = vsel %vm317, %v303, 0
        %v334 = vsel %vm317, %v304, 0
        %v337 = vsel %vm317, %v305, 0
        %v340 = vsel %vm317, %v306, 0
        %v343 = vsel %vm317, %v307, 0
        %v346 = vsel %vm317, %v308, 0
        %vm348 = vcmask 1043456
        %v350 = vsel %vm348, %v309, 0
        %352 = vmatprep.subr.mxu0 0.0
        %353 = vmatpush1.msra.mxu0 %v350
        %354 = vmatprep.subr.mxu0 0.0
        %355 = vmatpush1.msra.mxu0 0.0
        %356 = vmatprep.subr.mxu0 0.0
        %357 = vmatpush1.msra.mxu0 0.0
        %358 = vmatprep.subr.mxu0 0.0
        %359 = vmatpush1.msra.mxu0 0.0
        %360 = vmatprep.subr.mxu0 0.0
        %361 = vmatpush1.msra.mxu0 0.0
        %362 = vmatprep.subr.mxu0 0.0
        %363 = vmatpush1.msra.mxu0 0.0
        %364 = vmatprep.subr.mxu0 0.0
        %365 = vmatpush1.msra.mxu0 0.0
        %366 = vmatprep.subr.mxu0 0.0
        %367 = vmatpush1.msra.mxu0 0.0
        %368 = vmatprep.subr.mxu0 0.0
        %369 = vmatpush1.msra.mxu0 0.0
        %370 = vmatprep.subr.mxu0 0.0
        %371 = vmatpush1.msra.mxu0 0.0
        %372 = vmatprep.subr.mxu0 0.0
        %373 = vmatpush1.msra.mxu0 0.0
        %374 = vmatprep.subr.mxu0 0.0
        %375 = vmatpush1.msra.mxu0 0.0
        %376 = vmatprep.subr.mxu0 0.0
        %377 = vmatpush1.msra.mxu0 0.0
        %378 = vmatprep.subr.mxu0 0.0
        %379 = vmatpush1.msra.mxu0 0.0
        %380 = vmatprep.subr.mxu0 0.0
        %381 = vmatpush1.msra.mxu0 0.0
        %382 = vmatprep.subr.mxu0 0.0
        %383 = vmatpush1.msra.mxu0 0.0
        %384 = vmatprep.subr.mxu0 0.0
        %385 = vmatpush1.msra.mxu0 0.0
        %386 = vmatprep.subr.mxu0 0.0
        %387 = vmatpush1.msra.mxu0 0.0
        %388 = vmatprep.subr.mxu0 0.0
        %389 = vmatpush1.msra.mxu0 0.0
        %390 = vmatprep.subr.mxu0 0.0
        %391 = vmatpush1.msra.mxu0 0.0
        %392 = vmatprep.subr.mxu0 0.0
        %393 = vmatpush1.msra.mxu0 0.0
        %394 = vmatprep.subr.mxu0 0.0
        %395 = vmatpush1.msra.mxu0 0.0
        %396 = vmatprep.subr.mxu0 0.0
        %397 = vmatpush1.msra.mxu0 0.0
        %398 = vmatprep.subr.mxu0 0.0
        %399 = vmatpush1.msra.mxu0 0.0
        %400 = vmatprep.subr.mxu0 0.0
        %401 = vmatpush1.msra.mxu0 0.0
        %402 = vmatprep.subr.mxu0 0.0
        %403 = vmatpush1.msra.mxu0 0.0
        %404 = vmatprep.subr.mxu0 0.0
        %405 = vmatpush1.msra.mxu0 0.0
        %406 = vmatprep.subr.mxu0 0.0
        %407 = vmatpush1.msra.mxu0 0.0
        %408 = vmatprep.subr.mxu0 0.0
        %409 = vmatpush1.msra.mxu0 0.0
        %410 = vmatprep.subr.mxu0 0.0
        %411 = vmatpush1.msra.mxu0 0.0
        %412 = vmatprep.subr.mxu0 0.0
        %413 = vmatpush1.msra.mxu0 0.0
        %414 = vmatprep.subr.mxu0 0.0
        %415 = vmatpush1.msra.mxu0 0.0
        %416 = vmatprep.mubr.f32.mxu0 0.0
        %417 = vmatmul.mubr.f32.gmra.mrb[0].mxu0 %v319
        %v418 = vpop.f32.mrb[0].mxu0
        %v419 = vadd.f32 %v315, %v418
        %v420 = vpop.f32.mrb[0].mxu0
        %421 = vmatprep.mubr.f32.mxu0 0.0
        %422 = vmatmul.mubr.f32.gmra.mrb[0].mxu0 %v322
        %v423 = vpop.f32.mrb[0].mxu0
        %v424 = vadd.f32 %v315, %v423
        %v425 = vpop.f32.mrb[0].mxu0
        %426 = vmatprep.mubr.f32.mxu0 0.0
        %427 = vmatmul.mubr.f32.gmra.mrb[0].mxu0 %v325
        %v428 = vpop.f32.mrb[0].mxu0
        %v429 = vadd.f32 %v315, %v428
        %v430 = vpop.f32.mrb[0].mxu0
        %431 = vmatprep.mubr.f32.mxu0 0.0
        %432 = vmatmul.mubr.f32.gmra.mrb[0].mxu0 %v328
        %v433 = vpop.f32.mrb[0].mxu0
        %v434 = vadd.f32 %v315, %v433
        %v435 = vpop.f32.mrb[0].mxu0
        %436 = vmatprep.mubr.f32.mxu0 0.0
        %437 = vmatmul.mubr.f32.gmra.mrb[0].mxu0 %v331
        %v438 = vpop.f32.mrb[0].mxu0
        %v439 = vadd.f32 %v315, %v438
        %v440 = vpop.f32.mrb[0].mxu0
        %441 = vmatprep.mubr.f32.mxu0 0.0
        %442 = vmatmul.mubr.f32.gmra.mrb[0].mxu0 %v334
        %v443 = vpop.f32.mrb[0].mxu0
        %v444 = vadd.f32 %v315, %v443
        %v445 = vpop.f32.mrb[0].mxu0
        %446 = vmatprep.mubr.f32.mxu0 0.0
        %447 = vmatmul.mubr.f32.gmra.mrb[0].mxu0 %v337
        %v448 = vpop.f32.mrb[0].mxu0
        %v449 = vadd.f32 %v315, %v448
        %v450 = vpop.f32.mrb[0].mxu0
        %451 = vmatprep.mubr.f32.mxu0 0.0
        %452 = vmatmul.mubr.f32.gmra.mrb[0].mxu0 %v340
        %v453 = vpop.f32.mrb[0].mxu0
        %v454 = vadd.f32 %v315, %v453
        %v455 = vpop.f32.mrb[0].mxu0
        %456 = vmatprep.mubr.f32.mxu0 0.0
        %457 = vmatmul.mubr.f32.gmra.mrb[0].mxu0 %v343
        %v458 = vpop.f32.mrb[0].mxu0
        %v459 = vadd.f32 %v315, %v458
        %v460 = vpop.f32.mrb[0].mxu0
        %461 = vmatprep.mubr.f32.mxu0 0.0
        %462 = vmatmul.mubr.f32.gmra.mrb[0].mxu0 %v346
        %v463 = vpop.f32.mrb[0].mxu0
        %v464 = vadd.f32 %v315, %v463
        %v465 = vpop.f32.mrb[0].mxu0
        %466 = vdwg.mxu0
        %v467 = vand.u32 2147483647, %v419
        %vm468 = vcmp.le.f32.partialorder %v467, 0.7853982
        %vm469 = vcmp.lt.s32.totalorder %v419, 0
        %v470 = vand.u32 %v419, 2139095040
        %v471 = vshrl.u32 %v470, 23
        %v472 = vsub.s32 %v471, 127
        %v473 = vand.u32 2147483647, %v419
        %v474 = vand.u32 %v473, 8388607
        %v475 = vor.u32 %v474, 8388608
        %v476 = vsub.s32 0, %v475
        %v477 = vadd.s32 %v472, 1
        %vm478 = vcmp.gt.s32.totalorder %v477, 0
        %v479 = vsel %vm478, %v477, 0
        %v480 = vshrl.u32 %v479, 5
        %v481 = vand.u32 %v479, 31
        %v482 = vsub.s32 32, %v481
        %v483 = vshrl.u32 683565275, %v482
        %v484 = vshll.u32 683565275, %v481
        %v485 = vshrl.u32 2475754826, %v482
        %v486 = vor.u32 %v484, %v485
        %v487 = vshll.u32 2475754826, %v481
        %v488 = vshrl.u32 2131351028, %v482
        %v489 = vor.u32 %v487, %v488
        %v490 = vshll.u32 2131351028, %v481
        %v491 = vshrl.u32 2102212464, %v482
        %v492 = vor.u32 %v490, %v491
        %v493 = vshll.u32 2102212464, %v481
        %v494 = vshrl.u32 920167782, %v482
        %v495 = vor.u32 %v493, %v494
        %v496 = vshll.u32 920167782, %v481
        %v497 = vshrl.u32 1326507024, %v482
        %v498 = vor.u32 %v496, %v497
        %vm499 = vcmp.lt.s32.totalorder %v480, 1
        %vm500 = vcmp.lt.s32.totalorder %v480, 2
        %vm501 = vcmp.lt.s32.totalorder %v480, 3
        %vm502 = vcmp.lt.s32.totalorder %v480, 4
        %v503 = vsel %vm499, %v483, %v486
        %v504 = vsel %vm502, %v492, 2102212464
        %v505 = vsel %vm501, %v489, %v504
        %v506 = vsel %vm500, %v503, %v505
        %v507 = vsel %vm499, %v486, %v489
        %v508 = vsel %vm502, %v495, 920167782
        %v509 = vsel %vm501, %v492, %v508
        %v510 = vsel %vm500, %v507, %v509
        %v511 = vsel %vm499, %v489, %v492
        %v512 = vsel %vm502, %v498, 1326507024
        %v513 = vsel %vm501, %v495, %v512
        %v514 = vsel %vm500, %v511, %v513
        %v515 = vshll.u32 %v475, 8
        %v516 = vmul.u32.u64.compose %v515, %v514
        %v517 = vextract.low.u32 %v516
        %v518 = vextract.high.u32 %v516
        %v519 = vmul.u32.u64.compose %v515, %v510
        %v520 = vextract.low.u32 %v519
        %v521 = vextract.high.u32 %v519
        %v522 = vmul.u32 %v515, %v506
        %v523 = vadd.s32 %v518, %v520
        %vm524 = vc.u32 %v518, %v520
        %v525 = vadd.s32 %v521, 1
        %v526 = vsel %vm524, %v525, %v521
        %v527 = vadd.s32 %v522, %v526
        %v528 = vadd.s32 %v527, 536870912
        %v529 = vshrl.u32 %v528, 30
        %v530 = vshll.u32 %v529, 30
        %v531 = vsub.s32 %v527, %v530
        %vm532 = vcmp.lt.s32.totalorder %v531, 0
        %v533 = vsub.s32 0, %v531
        %v534 = vsel %vm532, %v533, %v531
        %v535 = vclz %v534
        %v536 = vsub.s32 %v535, 2
        %vm537 = vcmp.gt.s32.totalorder 0, %v536
        %v538 = vsel %vm537, 0, %v536
        %v539 = vsub.s32 32, %v538
        %v540 = vshll.u32 %v531, %v538
        %v541 = vshrl.u32 %v523, %v539
        %v542 = vor.u32 %v540, %v541
        %v543 = vsub.s32 4294967266, %v538
        %v544 = vadd.s32 %v543, 127
        %v545 = vshll.u32 %v544, 23
        %v546 = vor.u32 4788187, %v545
        %v547 = vand.u32 2147483647, %v546
        %v549 = vcvt.s32.f32 %v542
        %v550 = vmul.f32 %v549, %v547
        %v551 = vxor.u32 %v550, 2147483648
        %v552 = vsel %vm469, %v551, %v550
        %v553 = vsub.s32 4, %v529
        %v554 = vsel %vm469, %v553, %v529
        %v555 = vsel %vm468, %v419, %v552
        %v556 = vsel %vm468, 0, %v554
        %v557 = vcosq.f32.pop %v555
        %v558 = vsinq.f32.pop %v555
        %vm559 = vweird.f32 %v419
        %v560 = vand.u32 %v556, 3
        %vm561 = vcmp.lt.s32.totalorder %v560, 2
        %vm562 = vcmp.eq.s32.totalorder %v560, 0
        %v563 = vxor.u32 %v558, 2147483648
        %v564 = vsel %vm562, %v557, %v563
        %vm565 = vcmp.eq.s32.totalorder %v560, 2
        %v566 = vxor.u32 %v557, 2147483648
        %v567 = vsel %vm565, %v566, %v558
        %v568 = vsel %vm561, %v564, %v567
        %v569 = vsel %vm559, nan, %v568
        %v570 = vand.u32 2147483647, %v424
        %vm571 = vcmp.le.f32.partialorder %v570, 0.7853982
        %vm572 = vcmp.lt.s32.totalorder %v424, 0
        %v573 = vand.u32 %v424, 2139095040
        %v574 = vshrl.u32 %v573, 23
        %v575 = vsub.s32 %v574, 127
        %v576 = vand.u32 2147483647, %v424
        %v577 = vand.u32 %v576, 8388607
        %v578 = vor.u32 %v577, 8388608
        %v579 = vsub.s32 0, %v578
        %v580 = vadd.s32 %v575, 1
        %vm581 = vcmp.gt.s32.totalorder %v580, 0
        %v582 = vsel %vm581, %v580, 0
        %v583 = vshrl.u32 %v582, 5
        %v584 = vand.u32 %v582, 31
        %v585 = vsub.s32 32, %v584
        %v586 = vshrl.u32 683565275, %v585
        %v587 = vshll.u32 683565275, %v584
        %v588 = vshrl.u32 2475754826, %v585
        %v589 = vor.u32 %v587, %v588
        %v590 = vshll.u32 2475754826, %v584
        %v591 = vshrl.u32 2131351028, %v585
        %v592 = vor.u32 %v590, %v591
        %v593 = vshll.u32 2131351028, %v584
        %v594 = vshrl.u32 2102212464, %v585
        %v595 = vor.u32 %v593, %v594
        %v596 = vshll.u32 2102212464, %v584
        %v597 = vshrl.u32 920167782, %v585
        %v598 = vor.u32 %v596, %v597
        %v599 = vshll.u32 920167782, %v584
        %v600 = vshrl.u32 1326507024, %v585
        %v601 = vor.u32 %v599, %v600
        %vm602 = vcmp.lt.s32.totalorder %v583, 1
        %vm603 = vcmp.lt.s32.totalorder %v583, 2
        %vm604 = vcmp.lt.s32.totalorder %v583, 3
        %vm605 = vcmp.lt.s32.totalorder %v583, 4
        %v606 = vsel %vm602, %v586, %v589
        %v607 = vsel %vm605, %v595, 2102212464
        %v608 = vsel %vm604, %v592, %v607
        %v609 = vsel %vm603, %v606, %v608
        %v610 = vsel %vm602, %v589, %v592
        %v611 = vsel %vm605, %v598, 920167782
        %v612 = vsel %vm604, %v595, %v611
        %v613 = vsel %vm603, %v610, %v612
        %v614 = vsel %vm602, %v592, %v595
        %v615 = vsel %vm605, %v601, 1326507024
        %v616 = vsel %vm604, %v598, %v615
        %v617 = vsel %vm603, %v614, %v616
        %v618 = vshll.u32 %v578, 8
        %v619 = vmul.u32.u64.compose %v618, %v617
        %v620 = vextract.low.u32 %v619
        %v621 = vextract.high.u32 %v619
        %v622 = vmul.u32.u64.compose %v618, %v613
        %v623 = vextract.low.u32 %v622
        %v624 = vextract.high.u32 %v622
        %v625 = vmul.u32 %v618, %v609
        %v626 = vadd.s32 %v621, %v623
        %vm627 = vc.u32 %v621, %v623
        %v628 = vadd.s32 %v624, 1
        %v629 = vsel %vm627, %v628, %v624
        %v630 = vadd.s32 %v625, %v629
        %v631 = vadd.s32 %v630, 536870912
        %v632 = vshrl.u32 %v631, 30
        %v633 = vshll.u32 %v632, 30
        %v634 = vsub.s32 %v630, %v633
        %vm635 = vcmp.lt.s32.totalorder %v634, 0
        %v636 = vsub.s32 0, %v634
        %v637 = vsel %vm635, %v636, %v634
        %v638 = vclz %v637
        %v639 = vsub.s32 %v638, 2
        %vm640 = vcmp.gt.s32.totalorder 0, %v639
        %v641 = vsel %vm640, 0, %v639
        %v642 = vsub.s32 32, %v641
        %v643 = vshll.u32 %v634, %v641
        %v644 = vshrl.u32 %v626, %v642
        %v645 = vor.u32 %v643, %v644
        %v646 = vsub.s32 4294967266, %v641
        %v647 = vadd.s32 %v646, 127
        %v648 = vshll.u32 %v647, 23
        %v649 = vor.u32 4788187, %v648
        %v650 = vand.u32 2147483647, %v649
        %v652 = vcvt.s32.f32 %v645
        %v653 = vmul.f32 %v652, %v650
        %v654 = vxor.u32 %v653, 2147483648
        %v655 = vsel %vm572, %v654, %v653
        %v656 = vsub.s32 4, %v632
        %v657 = vsel %vm572, %v656, %v632
        %v658 = vsel %vm571, %v424, %v655
        %v659 = vsel %vm571, 0, %v657
        %v660 = vcosq.f32.pop %v658
        %v661 = vsinq.f32.pop %v658
        %vm662 = vweird.f32 %v424
        %v663 = vand.u32 %v659, 3
        %vm664 = vcmp.lt.s32.totalorder %v663, 2
        %vm665 = vcmp.eq.s32.totalorder %v663, 0
        %v666 = vxor.u32 %v661, 2147483648
        %v667 = vsel %vm665, %v660, %v666
        %vm668 = vcmp.eq.s32.totalorder %v663, 2
        %v669 = vxor.u32 %v660, 2147483648
        %v670 = vsel %vm668, %v669, %v661
        %v671 = vsel %vm664, %v667, %v670
        %v672 = vsel %vm662, nan, %v671
        %v673 = vand.u32 2147483647, %v429
        %vm674 = vcmp.le.f32.partialorder %v673, 0.7853982
        %vm675 = vcmp.lt.s32.totalorder %v429, 0
        %v676 = vand.u32 %v429, 2139095040
        %v677 = vshrl.u32 %v676, 23
        %v678 = vsub.s32 %v677, 127
        %v679 = vand.u32 2147483647, %v429
        %v680 = vand.u32 %v679, 8388607
        %v681 = vor.u32 %v680, 8388608
        %v682 = vsub.s32 0, %v681
        %v683 = vadd.s32 %v678, 1
        %vm684 = vcmp.gt.s32.totalorder %v683, 0
        %v685 = vsel %vm684, %v683, 0
        %v686 = vshrl.u32 %v685, 5
        %v687 = vand.u32 %v685, 31
        %v688 = vsub.s32 32, %v687
        %v689 = vshrl.u32 683565275, %v688
        %v690 = vshll.u32 683565275, %v687
        %v691 = vshrl.u32 2475754826, %v688
        %v692 = vor.u32 %v690, %v691
        %v693 = vshll.u32 2475754826, %v687
        %v694 = vshrl.u32 2131351028, %v688
        %v695 = vor.u32 %v693, %v694
        %v696 = vshll.u32 2131351028, %v687
        %v697 = vshrl.u32 2102212464, %v688
        %v698 = vor.u32 %v696, %v697
        %v699 = vshll.u32 2102212464, %v687
        %v700 = vshrl.u32 920167782, %v688
        %v701 = vor.u32 %v699, %v700
        %v702 = vshll.u32 920167782, %v687
        %v703 = vshrl.u32 1326507024, %v688
        %v704 = vor.u32 %v702, %v703
        %vm705 = vcmp.lt.s32.totalorder %v686, 1
        %vm706 = vcmp.lt.s32.totalorder %v686, 2
        %vm707 = vcmp.lt.s32.totalorder %v686, 3
        %vm708 = vcmp.lt.s32.totalorder %v686, 4
        %v709 = vsel %vm705, %v689, %v692
        %v710 = vsel %vm708, %v698, 2102212464
        %v711 = vsel %vm707, %v695, %v710
        %v712 = vsel %vm706, %v709, %v711
        %v713 = vsel %vm705, %v692, %v695
        %v714 = vsel %vm708, %v701, 920167782
        %v715 = vsel %vm707, %v698, %v714
        %v716 = vsel %vm706, %v713, %v715
        %v717 = vsel %vm705, %v695, %v698
        %v718 = vsel %vm708, %v704, 1326507024
        %v719 = vsel %vm707, %v701, %v718
        %v720 = vsel %vm706, %v717, %v719
        %v721 = vshll.u32 %v681, 8
        %v722 = vmul.u32.u64.compose %v721, %v720
        %v723 = vextract.low.u32 %v722
        %v724 = vextract.high.u32 %v722
        %v725 = vmul.u32.u64.compose %v721, %v716
        %v726 = vextract.low.u32 %v725
        %v727 = vextract.high.u32 %v725
        %v728 = vmul.u32 %v721, %v712
        %v729 = vadd.s32 %v724, %v726
        %vm730 = vc.u32 %v724, %v726
        %v731 = vadd.s32 %v727, 1
        %v732 = vsel %vm730, %v731, %v727
        %v733 = vadd.s32 %v728, %v732
        %v734 = vadd.s32 %v733, 536870912
        %v735 = vshrl.u32 %v734, 30
        %v736 = vshll.u32 %v735, 30
        %v737 = vsub.s32 %v733, %v736
        %vm738 = vcmp.lt.s32.totalorder %v737, 0
        %v739 = vsub.s32 0, %v737
        %v740 = vsel %vm738, %v739, %v737
        %v741 = vclz %v740
        %v742 = vsub.s32 %v741, 2
        %vm743 = vcmp.gt.s32.totalorder 0, %v742
        %v744 = vsel %vm743, 0, %v742
        %v745 = vsub.s32 32, %v744
        %v746 = vshll.u32 %v737, %v744
        %v747 = vshrl.u32 %v729, %v745
        %v748 = vor.u32 %v746, %v747
        %v749 = vsub.s32 4294967266, %v744
        %v750 = vadd.s32 %v749, 127
        %v751 = vshll.u32 %v750, 23
        %v752 = vor.u32 4788187, %v751
        %v753 = vand.u32 2147483647, %v752
        %v755 = vcvt.s32.f32 %v748
        %v756 = vmul.f32 %v755, %v753
        %v757 = vxor.u32 %v756, 2147483648
        %v758 = vsel %vm675, %v757, %v756
        %v759 = vsub.s32 4, %v735
        %v760 = vsel %vm675, %v759, %v735
        %v761 = vsel %vm674, %v429, %v758
        %v762 = vsel %vm674, 0, %v760
        %v763 = vcosq.f32.pop %v761
        %v764 = vsinq.f32.pop %v761
        %vm765 = vweird.f32 %v429
        %v766 = vand.u32 %v762, 3
        %vm767 = vcmp.lt.s32.totalorder %v766, 2
        %vm768 = vcmp.eq.s32.totalorder %v766, 0
        %v769 = vxor.u32 %v764, 2147483648
        %v770 = vsel %vm768, %v763, %v769
        %vm771 = vcmp.eq.s32.totalorder %v766, 2
        %v772 = vxor.u32 %v763, 2147483648
        %v773 = vsel %vm771, %v772, %v764
        %v774 = vsel %vm767, %v770, %v773
        %v775 = vsel %vm765, nan, %v774
        %v776 = vand.u32 2147483647, %v434
        %vm777 = vcmp.le.f32.partialorder %v776, 0.7853982
        %vm778 = vcmp.lt.s32.totalorder %v434, 0
        %v779 = vand.u32 %v434, 2139095040
        %v780 = vshrl.u32 %v779, 23
        %v781 = vsub.s32 %v780, 127
        %v782 = vand.u32 2147483647, %v434
        %v783 = vand.u32 %v782, 8388607
        %v784 = vor.u32 %v783, 8388608
        %v785 = vsub.s32 0, %v784
        %v786 = vadd.s32 %v781, 1
        %vm787 = vcmp.gt.s32.totalorder %v786, 0
        %v788 = vsel %vm787, %v786, 0
        %v789 = vshrl.u32 %v788, 5
        %v790 = vand.u32 %v788, 31
        %v791 = vsub.s32 32, %v790
        %v792 = vshrl.u32 683565275, %v791
        %v793 = vshll.u32 683565275, %v790
        %v794 = vshrl.u32 2475754826, %v791
        %v795 = vor.u32 %v793, %v794
        %v796 = vshll.u32 2475754826, %v790
        %v797 = vshrl.u32 2131351028, %v791
        %v798 = vor.u32 %v796, %v797
        %v799 = vshll.u32 2131351028, %v790
        %v800 = vshrl.u32 2102212464, %v791
        %v801 = vor.u32 %v799, %v800
        %v802 = vshll.u32 2102212464, %v790
        %v803 = vshrl.u32 920167782, %v791
        %v804 = vor.u32 %v802, %v803
        %v805 = vshll.u32 920167782, %v790
        %v806 = vshrl.u32 1326507024, %v791
        %v807 = vor.u32 %v805, %v806
        %vm808 = vcmp.lt.s32.totalorder %v789, 1
        %vm809 = vcmp.lt.s32.totalorder %v789, 2
        %vm810 = vcmp.lt.s32.totalorder %v789, 3
        %vm811 = vcmp.lt.s32.totalorder %v789, 4
        %v812 = vsel %vm808, %v792, %v795
        %v813 = vsel %vm811, %v801, 2102212464
        %v814 = vsel %vm810, %v798, %v813
        %v815 = vsel %vm809, %v812, %v814
        %v816 = vsel %vm808, %v795, %v798
        %v817 = vsel %vm811, %v804, 920167782
        %v818 = vsel %vm810, %v801, %v817
        %v819 = vsel %vm809, %v816, %v818
        %v820 = vsel %vm808, %v798, %v801
        %v821 = vsel %vm811, %v807, 1326507024
        %v822 = vsel %vm810, %v804, %v821
        %v823 = vsel %vm809, %v820, %v822
        %v824 = vshll.u32 %v784, 8
        %v825 = vmul.u32.u64.compose %v824, %v823
        %v826 = vextract.low.u32 %v825
        %v827 = vextract.high.u32 %v825
        %v828 = vmul.u32.u64.compose %v824, %v819
        %v829 = vextract.low.u32 %v828
        %v830 = vextract.high.u32 %v828
        %v831 = vmul.u32 %v824, %v815
        %v832 = vadd.s32 %v827, %v829
        %vm833 = vc.u32 %v827, %v829
        %v834 = vadd.s32 %v830, 1
        %v835 = vsel %vm833, %v834, %v830
        %v836 = vadd.s32 %v831, %v835
        %v837 = vadd.s32 %v836, 536870912
        %v838 = vshrl.u32 %v837, 30
        %v839 = vshll.u32 %v838, 30
        %v840 = vsub.s32 %v836, %v839
        %vm841 = vcmp.lt.s32.totalorder %v840, 0
        %v842 = vsub.s32 0, %v840
        %v843 = vsel %vm841, %v842, %v840
        %v844 = vclz %v843
        %v845 = vsub.s32 %v844, 2
        %vm846 = vcmp.gt.s32.totalorder 0, %v845
        %v847 = vsel %vm846, 0, %v845
        %v848 = vsub.s32 32, %v847
        %v849 = vshll.u32 %v840, %v847
        %v850 = vshrl.u32 %v832, %v848
        %v851 = vor.u32 %v849, %v850
        %v852 = vsub.s32 4294967266, %v847
        %v853 = vadd.s32 %v852, 127
        %v854 = vshll.u32 %v853, 23
        %v855 = vor.u32 4788187, %v854
        %v856 = vand.u32 2147483647, %v855
        %v858 = vcvt.s32.f32 %v851
        %v859 = vmul.f32 %v858, %v856
        %v860 = vxor.u32 %v859, 2147483648
        %v861 = vsel %vm778, %v860, %v859
        %v862 = vsub.s32 4, %v838
        %v863 = vsel %vm778, %v862, %v838
        %v864 = vsel %vm777, %v434, %v861
        %v865 = vsel %vm777, 0, %v863
        %v866 = vcosq.f32.pop %v864
        %v867 = vsinq.f32.pop %v864
        %vm868 = vweird.f32 %v434
        %v869 = vand.u32 %v865, 3
        %vm870 = vcmp.lt.s32.totalorder %v869, 2
        %vm871 = vcmp.eq.s32.totalorder %v869, 0
        %v872 = vxor.u32 %v867, 2147483648
        %v873 = vsel %vm871, %v866, %v872
        %vm874 = vcmp.eq.s32.totalorder %v869, 2
        %v875 = vxor.u32 %v866, 2147483648
        %v876 = vsel %vm874, %v875, %v867
        %v877 = vsel %vm870, %v873, %v876
        %v878 = vsel %vm868, nan, %v877
        %v879 = vand.u32 2147483647, %v439
        %vm880 = vcmp.le.f32.partialorder %v879, 0.7853982
        %vm881 = vcmp.lt.s32.totalorder %v439, 0
        %v882 = vand.u32 %v439, 2139095040
        %v883 = vshrl.u32 %v882, 23
        %v884 = vsub.s32 %v883, 127
        %v885 = vand.u32 2147483647, %v439
        %v886 = vand.u32 %v885, 8388607
        %v887 = vor.u32 %v886, 8388608
        %v888 = vsub.s32 0, %v887
        %v889 = vadd.s32 %v884, 1
        %vm890 = vcmp.gt.s32.totalorder %v889, 0
        %v891 = vsel %vm890, %v889, 0
        %v892 = vshrl.u32 %v891, 5
        %v893 = vand.u32 %v891, 31
        %v894 = vsub.s32 32, %v893
        %v895 = vshrl.u32 683565275, %v894
        %v896 = vshll.u32 683565275, %v893
        %v897 = vshrl.u32 2475754826, %v894
        %v898 = vor.u32 %v896, %v897
        %v899 = vshll.u32 2475754826, %v893
        %v900 = vshrl.u32 2131351028, %v894
        %v901 = vor.u32 %v899, %v900
        %v902 = vshll.u32 2131351028, %v893
        %v903 = vshrl.u32 2102212464, %v894
        %v904 = vor.u32 %v902, %v903
        %v905 = vshll.u32 2102212464, %v893
        %v906 = vshrl.u32 920167782, %v894
        %v907 = vor.u32 %v905, %v906
        %v908 = vshll.u32 920167782, %v893
        %v909 = vshrl.u32 1326507024, %v894
        %v910 = vor.u32 %v908, %v909
        %vm911 = vcmp.lt.s32.totalorder %v892, 1
        %vm912 = vcmp.lt.s32.totalorder %v892, 2
        %vm913 = vcmp.lt.s32.totalorder %v892, 3
        %vm914 = vcmp.lt.s32.totalorder %v892, 4
        %v915 = vsel %vm911, %v895, %v898
        %v916 = vsel %vm914, %v904, 2102212464
        %v917 = vsel %vm913, %v901, %v916
        %v918 = vsel %vm912, %v915, %v917
        %v919 = vsel %vm911, %v898, %v901
        %v920 = vsel %vm914, %v907, 920167782
        %v921 = vsel %vm913, %v904, %v920
        %v922 = vsel %vm912, %v919, %v921
        %v923 = vsel %vm911, %v901, %v904
        %v924 = vsel %vm914, %v910, 1326507024
        %v925 = vsel %vm913, %v907, %v924
        %v926 = vsel %vm912, %v923, %v925
        %v927 = vshll.u32 %v887, 8
        %v928 = vmul.u32.u64.compose %v927, %v926
        %v929 = vextract.low.u32 %v928
        %v930 = vextract.high.u32 %v928
        %v931 = vmul.u32.u64.compose %v927, %v922
        %v932 = vextract.low.u32 %v931
        %v933 = vextract.high.u32 %v931
        %v934 = vmul.u32 %v927, %v918
        %v935 = vadd.s32 %v930, %v932
        %vm936 = vc.u32 %v930, %v932
        %v937 = vadd.s32 %v933, 1
        %v938 = vsel %vm936, %v937, %v933
        %v939 = vadd.s32 %v934, %v938
        %v940 = vadd.s32 %v939, 536870912
        %v941 = vshrl.u32 %v940, 30
        %v942 = vshll.u32 %v941, 30
        %v943 = vsub.s32 %v939, %v942
        %vm944 = vcmp.lt.s32.totalorder %v943, 0
        %v945 = vsub.s32 0, %v943
        %v946 = vsel %vm944, %v945, %v943
        %v947 = vclz %v946
        %v948 = vsub.s32 %v947, 2
        %vm949 = vcmp.gt.s32.totalorder 0, %v948
        %v950 = vsel %vm949, 0, %v948
        %v951 = vsub.s32 32, %v950
        %v952 = vshll.u32 %v943, %v950
        %v953 = vshrl.u32 %v935, %v951
        %v954 = vor.u32 %v952, %v953
        %v955 = vsub.s32 4294967266, %v950
        %v956 = vadd.s32 %v955, 127
        %v957 = vshll.u32 %v956, 23
        %v958 = vor.u32 4788187, %v957
        %v959 = vand.u32 2147483647, %v958
        %v961 = vcvt.s32.f32 %v954
        %v962 = vmul.f32 %v961, %v959
        %v963 = vxor.u32 %v962, 2147483648
        %v964 = vsel %vm881, %v963, %v962
        %v965 = vsub.s32 4, %v941
        %v966 = vsel %vm881, %v965, %v941
        %v967 = vsel %vm880, %v439, %v964
        %v968 = vsel %vm880, 0, %v966
        %v969 = vcosq.f32.pop %v967
        %v970 = vsinq.f32.pop %v967
        %vm971 = vweird.f32 %v439
        %v972 = vand.u32 %v968, 3
        %vm973 = vcmp.lt.s32.totalorder %v972, 2
        %vm974 = vcmp.eq.s32.totalorder %v972, 0
        %v975 = vxor.u32 %v970, 2147483648
        %v976 = vsel %vm974, %v969, %v975
        %vm977 = vcmp.eq.s32.totalorder %v972, 2
        %v978 = vxor.u32 %v969, 2147483648
        %v979 = vsel %vm977, %v978, %v970
        %v980 = vsel %vm973, %v976, %v979
        %v981 = vsel %vm971, nan, %v980
        %v982 = vand.u32 2147483647, %v444
        %vm983 = vcmp.le.f32.partialorder %v982, 0.7853982
        %vm984 = vcmp.lt.s32.totalorder %v444, 0
        %v985 = vand.u32 %v444, 2139095040
        %v986 = vshrl.u32 %v985, 23
        %v987 = vsub.s32 %v986, 127
        %v988 = vand.u32 2147483647, %v444
        %v989 = vand.u32 %v988, 8388607
        %v990 = vor.u32 %v989, 8388608
        %v991 = vsub.s32 0, %v990
        %v992 = vadd.s32 %v987, 1
        %vm993 = vcmp.gt.s32.totalorder %v992, 0
        %v994 = vsel %vm993, %v992, 0
        %v995 = vshrl.u32 %v994, 5
        %v996 = vand.u32 %v994, 31
        %v997 = vsub.s32 32, %v996
        %v998 = vshrl.u32 683565275, %v997
        %v999 = vshll.u32 683565275, %v996
        %v1000 = vshrl.u32 2475754826, %v997
        %v1001 = vor.u32 %v999, %v1000
        %v1002 = vshll.u32 2475754826, %v996
        %v1003 = vshrl.u32 2131351028, %v997
        %v1004 = vor.u32 %v1002, %v1003
        %v1005 = vshll.u32 2131351028, %v996
        %v1006 = vshrl.u32 2102212464, %v997
        %v1007 = vor.u32 %v1005, %v1006
        %v1008 = vshll.u32 2102212464, %v996
        %v1009 = vshrl.u32 920167782, %v997
        %v1010 = vor.u32 %v1008, %v1009
        %v1011 = vshll.u32 920167782, %v996
        %v1012 = vshrl.u32 1326507024, %v997
        %v1013 = vor.u32 %v1011, %v1012
        %vm1014 = vcmp.lt.s32.totalorder %v995, 1
        %vm1015 = vcmp.lt.s32.totalorder %v995, 2
        %vm1016 = vcmp.lt.s32.totalorder %v995, 3
        %vm1017 = vcmp.lt.s32.totalorder %v995, 4
        %v1018 = vsel %vm1014, %v998, %v1001
        %v1019 = vsel %vm1017, %v1007, 2102212464
        %v1020 = vsel %vm1016, %v1004, %v1019
        %v1021 = vsel %vm1015, %v1018, %v1020
        %v1022 = vsel %vm1014, %v1001, %v1004
        %v1023 = vsel %vm1017, %v1010, 920167782
        %v1024 = vsel %vm1016, %v1007, %v1023
        %v1025 = vsel %vm1015, %v1022, %v1024
        %v1026 = vsel %vm1014, %v1004, %v1007
        %v1027 = vsel %vm1017, %v1013, 1326507024
        %v1028 = vsel %vm1016, %v1010, %v1027
        %v1029 = vsel %vm1015, %v1026, %v1028
        %v1030 = vshll.u32 %v990, 8
        %v1031 = vmul.u32.u64.compose %v1030, %v1029
        %v1032 = vextract.low.u32 %v1031
        %v1033 = vextract.high.u32 %v1031
        %v1034 = vmul.u32.u64.compose %v1030, %v1025
        %v1035 = vextract.low.u32 %v1034
        %v1036 = vextract.high.u32 %v1034
        %v1037 = vmul.u32 %v1030, %v1021
        %v1038 = vadd.s32 %v1033, %v1035
        %vm1039 = vc.u32 %v1033, %v1035
        %v1040 = vadd.s32 %v1036, 1
        %v1041 = vsel %vm1039, %v1040, %v1036
        %v1042 = vadd.s32 %v1037, %v1041
        %v1043 = vadd.s32 %v1042, 536870912
        %v1044 = vshrl.u32 %v1043, 30
        %v1045 = vshll.u32 %v1044, 30
        %v1046 = vsub.s32 %v1042, %v1045
        %vm1047 = vcmp.lt.s32.totalorder %v1046, 0
        %v1048 = vsub.s32 0, %v1046
        %v1049 = vsel %vm1047, %v1048, %v1046
        %v1050 = vclz %v1049
        %v1051 = vsub.s32 %v1050, 2
        %vm1052 = vcmp.gt.s32.totalorder 0, %v1051
        %v1053 = vsel %vm1052, 0, %v1051
        %v1054 = vsub.s32 32, %v1053
        %v1055 = vshll.u32 %v1046, %v1053
        %v1056 = vshrl.u32 %v1038, %v1054
        %v1057 = vor.u32 %v1055, %v1056
        %v1058 = vsub.s32 4294967266, %v1053
        %v1059 = vadd.s32 %v1058, 127
        %v1060 = vshll.u32 %v1059, 23
        %v1061 = vor.u32 4788187, %v1060
        %v1062 = vand.u32 2147483647, %v1061
        %v1064 = vcvt.s32.f32 %v1057
        %v1065 = vmul.f32 %v1064, %v1062
        %v1066 = vxor.u32 %v1065, 2147483648
        %v1067 = vsel %vm984, %v1066, %v1065
        %v1068 = vsub.s32 4, %v1044
        %v1069 = vsel %vm984, %v1068, %v1044
        %v1070 = vsel %vm983, %v444, %v1067
        %v1071 = vsel %vm983, 0, %v1069
        %v1072 = vcosq.f32.pop %v1070
        %v1073 = vsinq.f32.pop %v1070
        %vm1074 = vweird.f32 %v444
        %v1075 = vand.u32 %v1071, 3
        %vm1076 = vcmp.lt.s32.totalorder %v1075, 2
        %vm1077 = vcmp.eq.s32.totalorder %v1075, 0
        %v1078 = vxor.u32 %v1073, 2147483648
        %v1079 = vsel %vm1077, %v1072, %v1078
        %vm1080 = vcmp.eq.s32.totalorder %v1075, 2
        %v1081 = vxor.u32 %v1072, 2147483648
        %v1082 = vsel %vm1080, %v1081, %v1073
        %v1083 = vsel %vm1076, %v1079, %v1082
        %v1084 = vsel %vm1074, nan, %v1083
        %v1085 = vand.u32 2147483647, %v449
        %vm1086 = vcmp.le.f32.partialorder %v1085, 0.7853982
        %vm1087 = vcmp.lt.s32.totalorder %v449, 0
        %v1088 = vand.u32 %v449, 2139095040
        %v1089 = vshrl.u32 %v1088, 23
        %v1090 = vsub.s32 %v1089, 127
        %v1091 = vand.u32 2147483647, %v449
        %v1092 = vand.u32 %v1091, 8388607
        %v1093 = vor.u32 %v1092, 8388608
        %v1094 = vsub.s32 0, %v1093
        %v1095 = vadd.s32 %v1090, 1
        %vm1096 = vcmp.gt.s32.totalorder %v1095, 0
        %v1097 = vsel %vm1096, %v1095, 0
        %v1098 = vshrl.u32 %v1097, 5
        %v1099 = vand.u32 %v1097, 31
        %v1100 = vsub.s32 32, %v1099
        %v1101 = vshrl.u32 683565275, %v1100
        %v1102 = vshll.u32 683565275, %v1099
        %v1103 = vshrl.u32 2475754826, %v1100
        %v1104 = vor.u32 %v1102, %v1103
        %v1105 = vshll.u32 2475754826, %v1099
        %v1106 = vshrl.u32 2131351028, %v1100
        %v1107 = vor.u32 %v1105, %v1106
        %v1108 = vshll.u32 2131351028, %v1099
        %v1109 = vshrl.u32 2102212464, %v1100
        %v1110 = vor.u32 %v1108, %v1109
        %v1111 = vshll.u32 2102212464, %v1099
        %v1112 = vshrl.u32 920167782, %v1100
        %v1113 = vor.u32 %v1111, %v1112
        %v1114 = vshll.u32 920167782, %v1099
        %v1115 = vshrl.u32 1326507024, %v1100
        %v1116 = vor.u32 %v1114, %v1115
        %vm1117 = vcmp.lt.s32.totalorder %v1098, 1
        %vm1118 = vcmp.lt.s32.totalorder %v1098, 2
        %vm1119 = vcmp.lt.s32.totalorder %v1098, 3
        %vm1120 = vcmp.lt.s32.totalorder %v1098, 4
        %v1121 = vsel %vm1117, %v1101, %v1104
        %v1122 = vsel %vm1120, %v1110, 2102212464
        %v1123 = vsel %vm1119, %v1107, %v1122
        %v1124 = vsel %vm1118, %v1121, %v1123
        %v1125 = vsel %vm1117, %v1104, %v1107
        %v1126 = vsel %vm1120, %v1113, 920167782
        %v1127 = vsel %vm1119, %v1110, %v1126
        %v1128 = vsel %vm1118, %v1125, %v1127
        %v1129 = vsel %vm1117, %v1107, %v1110
        %v1130 = vsel %vm1120, %v1116, 1326507024
        %v1131 = vsel %vm1119, %v1113, %v1130
        %v1132 = vsel %vm1118, %v1129, %v1131
        %v1133 = vshll.u32 %v1093, 8
        %v1134 = vmul.u32.u64.compose %v1133, %v1132
        %v1135 = vextract.low.u32 %v1134
        %v1136 = vextract.high.u32 %v1134
        %v1137 = vmul.u32.u64.compose %v1133, %v1128
        %v1138 = vextract.low.u32 %v1137
        %v1139 = vextract.high.u32 %v1137
        %v1140 = vmul.u32 %v1133, %v1124
        %v1141 = vadd.s32 %v1136, %v1138
        %vm1142 = vc.u32 %v1136, %v1138
        %v1143 = vadd.s32 %v1139, 1
        %v1144 = vsel %vm1142, %v1143, %v1139
        %v1145 = vadd.s32 %v1140, %v1144
        %v1146 = vadd.s32 %v1145, 536870912
        %v1147 = vshrl.u32 %v1146, 30
        %v1148 = vshll.u32 %v1147, 30
        %v1149 = vsub.s32 %v1145, %v1148
        %vm1150 = vcmp.lt.s32.totalorder %v1149, 0
        %v1151 = vsub.s32 0, %v1149
        %v1152 = vsel %vm1150, %v1151, %v1149
        %v1153 = vclz %v1152
        %v1154 = vsub.s32 %v1153, 2
        %vm1155 = vcmp.gt.s32.totalorder 0, %v1154
        %v1156 = vsel %vm1155, 0, %v1154
        %v1157 = vsub.s32 32, %v1156
        %v1158 = vshll.u32 %v1149, %v1156
        %v1159 = vshrl.u32 %v1141, %v1157
        %v1160 = vor.u32 %v1158, %v1159
        %v1161 = vsub.s32 4294967266, %v1156
        %v1162 = vadd.s32 %v1161, 127
        %v1163 = vshll.u32 %v1162, 23
        %v1164 = vor.u32 4788187, %v1163
        %v1165 = vand.u32 2147483647, %v1164
        %v1167 = vcvt.s32.f32 %v1160
        %v1168 = vmul.f32 %v1167, %v1165
        %v1169 = vxor.u32 %v1168, 2147483648
        %v1170 = vsel %vm1087, %v1169, %v1168
        %v1171 = vsub.s32 4, %v1147
        %v1172 = vsel %vm1087, %v1171, %v1147
        %v1173 = vsel %vm1086, %v449, %v1170
        %v1174 = vsel %vm1086, 0, %v1172
        %v1175 = vcosq.f32.pop %v1173
        %v1176 = vsinq.f32.pop %v1173
        %vm1177 = vweird.f32 %v449
        %v1178 = vand.u32 %v1174, 3
        %vm1179 = vcmp.lt.s32.totalorder %v1178, 2
        %vm1180 = vcmp.eq.s32.totalorder %v1178, 0
        %v1181 = vxor.u32 %v1176, 2147483648
        %v1182 = vsel %vm1180, %v1175, %v1181
        %vm1183 = vcmp.eq.s32.totalorder %v1178, 2
        %v1184 = vxor.u32 %v1175, 2147483648
        %v1185 = vsel %vm1183, %v1184, %v1176
        %v1186 = vsel %vm1179, %v1182, %v1185
        %v1187 = vsel %vm1177, nan, %v1186
        %v1188 = vand.u32 2147483647, %v454
        %vm1189 = vcmp.le.f32.partialorder %v1188, 0.7853982
        %vm1190 = vcmp.lt.s32.totalorder %v454, 0
        %v1191 = vand.u32 %v454, 2139095040
        %v1192 = vshrl.u32 %v1191, 23
        %v1193 = vsub.s32 %v1192, 127
        %v1194 = vand.u32 2147483647, %v454
        %v1195 = vand.u32 %v1194, 8388607
        %v1196 = vor.u32 %v1195, 8388608
        %v1197 = vsub.s32 0, %v1196
        %v1198 = vadd.s32 %v1193, 1
        %vm1199 = vcmp.gt.s32.totalorder %v1198, 0
        %v1200 = vsel %vm1199, %v1198, 0
        %v1201 = vshrl.u32 %v1200, 5
        %v1202 = vand.u32 %v1200, 31
        %v1203 = vsub.s32 32, %v1202
        %v1204 = vshrl.u32 683565275, %v1203
        %v1205 = vshll.u32 683565275, %v1202
        %v1206 = vshrl.u32 2475754826, %v1203
        %v1207 = vor.u32 %v1205, %v1206
        %v1208 = vshll.u32 2475754826, %v1202
        %v1209 = vshrl.u32 2131351028, %v1203
        %v1210 = vor.u32 %v1208, %v1209
        %v1211 = vshll.u32 2131351028, %v1202
        %v1212 = vshrl.u32 2102212464, %v1203
        %v1213 = vor.u32 %v1211, %v1212
        %v1214 = vshll.u32 2102212464, %v1202
        %v1215 = vshrl.u32 920167782, %v1203
        %v1216 = vor.u32 %v1214, %v1215
        %v1217 = vshll.u32 920167782, %v1202
        %v1218 = vshrl.u32 1326507024, %v1203
        %v1219 = vor.u32 %v1217, %v1218
        %vm1220 = vcmp.lt.s32.totalorder %v1201, 1
        %vm1221 = vcmp.lt.s32.totalorder %v1201, 2
        %vm1222 = vcmp.lt.s32.totalorder %v1201, 3
        %vm1223 = vcmp.lt.s32.totalorder %v1201, 4
        %v1224 = vsel %vm1220, %v1204, %v1207
        %v1225 = vsel %vm1223, %v1213, 2102212464
        %v1226 = vsel %vm1222, %v1210, %v1225
        %v1227 = vsel %vm1221, %v1224, %v1226
        %v1228 = vsel %vm1220, %v1207, %v1210
        %v1229 = vsel %vm1223, %v1216, 920167782
        %v1230 = vsel %vm1222, %v1213, %v1229
        %v1231 = vsel %vm1221, %v1228, %v1230
        %v1232 = vsel %vm1220, %v1210, %v1213
        %v1233 = vsel %vm1223, %v1219, 1326507024
        %v1234 = vsel %vm1222, %v1216, %v1233
        %v1235 = vsel %vm1221, %v1232, %v1234
        %v1236 = vshll.u32 %v1196, 8
        %v1237 = vmul.u32.u64.compose %v1236, %v1235
        %v1238 = vextract.low.u32 %v1237
        %v1239 = vextract.high.u32 %v1237
        %v1240 = vmul.u32.u64.compose %v1236, %v1231
        %v1241 = vextract.low.u32 %v1240
        %v1242 = vextract.high.u32 %v1240
        %v1243 = vmul.u32 %v1236, %v1227
        %v1244 = vadd.s32 %v1239, %v1241
        %vm1245 = vc.u32 %v1239, %v1241
        %v1246 = vadd.s32 %v1242, 1
        %v1247 = vsel %vm1245, %v1246, %v1242
        %v1248 = vadd.s32 %v1243, %v1247
        %v1249 = vadd.s32 %v1248, 536870912
        %v1250 = vshrl.u32 %v1249, 30
        %v1251 = vshll.u32 %v1250, 30
        %v1252 = vsub.s32 %v1248, %v1251
        %vm1253 = vcmp.lt.s32.totalorder %v1252, 0
        %v1254 = vsub.s32 0, %v1252
        %v1255 = vsel %vm1253, %v1254, %v1252
        %v1256 = vclz %v1255
        %v1257 = vsub.s32 %v1256, 2
        %vm1258 = vcmp.gt.s32.totalorder 0, %v1257
        %v1259 = vsel %vm1258, 0, %v1257
        %v1260 = vsub.s32 32, %v1259
        %v1261 = vshll.u32 %v1252, %v1259
        %v1262 = vshrl.u32 %v1244, %v1260
        %v1263 = vor.u32 %v1261, %v1262
        %v1264 = vsub.s32 4294967266, %v1259
        %v1265 = vadd.s32 %v1264, 127
        %v1266 = vshll.u32 %v1265, 23
        %v1267 = vor.u32 4788187, %v1266
        %v1268 = vand.u32 2147483647, %v1267
        %v1270 = vcvt.s32.f32 %v1263
        %v1271 = vmul.f32 %v1270, %v1268
        %v1272 = vxor.u32 %v1271, 2147483648
        %v1273 = vsel %vm1190, %v1272, %v1271
        %v1274 = vsub.s32 4, %v1250
        %v1275 = vsel %vm1190, %v1274, %v1250
        %v1276 = vsel %vm1189, %v454, %v1273
        %v1277 = vsel %vm1189, 0, %v1275
        %v1278 = vcosq.f32.pop %v1276
        %v1279 = vsinq.f32.pop %v1276
        %vm1280 = vweird.f32 %v454
        %v1281 = vand.u32 %v1277, 3
        %vm1282 = vcmp.lt.s32.totalorder %v1281, 2
        %vm1283 = vcmp.eq.s32.totalorder %v1281, 0
        %v1284 = vxor.u32 %v1279, 2147483648
        %v1285 = vsel %vm1283, %v1278, %v1284
        %vm1286 = vcmp.eq.s32.totalorder %v1281, 2
        %v1287 = vxor.u32 %v1278, 2147483648
        %v1288 = vsel %vm1286, %v1287, %v1279
        %v1289 = vsel %vm1282, %v1285, %v1288
        %v1290 = vsel %vm1280, nan, %v1289
        %v1291 = vand.u32 2147483647, %v459
        %vm1292 = vcmp.le.f32.partialorder %v1291, 0.7853982
        %vm1293 = vcmp.lt.s32.totalorder %v459, 0
        %v1294 = vand.u32 %v459, 2139095040
        %v1295 = vshrl.u32 %v1294, 23
        %v1296 = vsub.s32 %v1295, 127
        %v1297 = vand.u32 2147483647, %v459
        %v1298 = vand.u32 %v1297, 8388607
        %v1299 = vor.u32 %v1298, 8388608
        %v1300 = vsub.s32 0, %v1299
        %v1301 = vadd.s32 %v1296, 1
        %vm1302 = vcmp.gt.s32.totalorder %v1301, 0
        %v1303 = vsel %vm1302, %v1301, 0
        %v1304 = vshrl.u32 %v1303, 5
        %v1305 = vand.u32 %v1303, 31
        %v1306 = vsub.s32 32, %v1305
        %v1307 = vshrl.u32 683565275, %v1306
        %v1308 = vshll.u32 683565275, %v1305
        %v1309 = vshrl.u32 2475754826, %v1306
        %v1310 = vor.u32 %v1308, %v1309
        %v1311 = vshll.u32 2475754826, %v1305
        %v1312 = vshrl.u32 2131351028, %v1306
        %v1313 = vor.u32 %v1311, %v1312
        %v1314 = vshll.u32 2131351028, %v1305
        %v1315 = vshrl.u32 2102212464, %v1306
        %v1316 = vor.u32 %v1314, %v1315
        %v1317 = vshll.u32 2102212464, %v1305
        %v1318 = vshrl.u32 920167782, %v1306
        %v1319 = vor.u32 %v1317, %v1318
        %v1320 = vshll.u32 920167782, %v1305
        %v1321 = vshrl.u32 1326507024, %v1306
        %v1322 = vor.u32 %v1320, %v1321
        %vm1323 = vcmp.lt.s32.totalorder %v1304, 1
        %vm1324 = vcmp.lt.s32.totalorder %v1304, 2
        %vm1325 = vcmp.lt.s32.totalorder %v1304, 3
        %vm1326 = vcmp.lt.s32.totalorder %v1304, 4
        %v1327 = vsel %vm1323, %v1307, %v1310
        %v1328 = vsel %vm1326, %v1316, 2102212464
        %v1329 = vsel %vm1325, %v1313, %v1328
        %v1330 = vsel %vm1324, %v1327, %v1329
        %v1331 = vsel %vm1323, %v1310, %v1313
        %v1332 = vsel %vm1326, %v1319, 920167782
        %v1333 = vsel %vm1325, %v1316, %v1332
        %v1334 = vsel %vm1324, %v1331, %v1333
        %v1335 = vsel %vm1323, %v1313, %v1316
        %v1336 = vsel %vm1326, %v1322, 1326507024
        %v1337 = vsel %vm1325, %v1319, %v1336
        %v1338 = vsel %vm1324, %v1335, %v1337
        %v1339 = vshll.u32 %v1299, 8
        %v1340 = vmul.u32.u64.compose %v1339, %v1338
        %v1341 = vextract.low.u32 %v1340
        %v1342 = vextract.high.u32 %v1340
        %v1343 = vmul.u32.u64.compose %v1339, %v1334
        %v1344 = vextract.low.u32 %v1343
        %v1345 = vextract.high.u32 %v1343
        %v1346 = vmul.u32 %v1339, %v1330
        %v1347 = vadd.s32 %v1342, %v1344
        %vm1348 = vc.u32 %v1342, %v1344
        %v1349 = vadd.s32 %v1345, 1
        %v1350 = vsel %vm1348, %v1349, %v1345
        %v1351 = vadd.s32 %v1346, %v1350
        %v1352 = vadd.s32 %v1351, 536870912
        %v1353 = vshrl.u32 %v1352, 30
        %v1354 = vshll.u32 %v1353, 30
        %v1355 = vsub.s32 %v1351, %v1354
        %vm1356 = vcmp.lt.s32.totalorder %v1355, 0
        %v1357 = vsub.s32 0, %v1355
        %v1358 = vsel %vm1356, %v1357, %v1355
        %v1359 = vclz %v1358
        %v1360 = vsub.s32 %v1359, 2
        %vm1361 = vcmp.gt.s32.totalorder 0, %v1360
        %v1362 = vsel %vm1361, 0, %v1360
        %v1363 = vsub.s32 32, %v1362
        %v1364 = vshll.u32 %v1355, %v1362
        %v1365 = vshrl.u32 %v1347, %v1363
        %v1366 = vor.u32 %v1364, %v1365
        %v1367 = vsub.s32 4294967266, %v1362
        %v1368 = vadd.s32 %v1367, 127
        %v1369 = vshll.u32 %v1368, 23
        %v1370 = vor.u32 4788187, %v1369
        %v1371 = vand.u32 2147483647, %v1370
        %v1373 = vcvt.s32.f32 %v1366
        %v1374 = vmul.f32 %v1373, %v1371
        %v1375 = vxor.u32 %v1374, 2147483648
        %v1376 = vsel %vm1293, %v1375, %v1374
        %v1377 = vsub.s32 4, %v1353
        %v1378 = vsel %vm1293, %v1377, %v1353
        %v1379 = vsel %vm1292, %v459, %v1376
        %v1380 = vsel %vm1292, 0, %v1378
        %v1381 = vcosq.f32.pop %v1379
        %v1382 = vsinq.f32.pop %v1379
        %vm1383 = vweird.f32 %v459
        %v1384 = vand.u32 %v1380, 3
        %vm1385 = vcmp.lt.s32.totalorder %v1384, 2
        %vm1386 = vcmp.eq.s32.totalorder %v1384, 0
        %v1387 = vxor.u32 %v1382, 2147483648
        %v1388 = vsel %vm1386, %v1381, %v1387
        %vm1389 = vcmp.eq.s32.totalorder %v1384, 2
        %v1390 = vxor.u32 %v1381, 2147483648
        %v1391 = vsel %vm1389, %v1390, %v1382
        %v1392 = vsel %vm1385, %v1388, %v1391
        %v1393 = vsel %vm1383, nan, %v1392
        %v1394 = vand.u32 2147483647, %v464
        %vm1395 = vcmp.le.f32.partialorder %v1394, 0.7853982
        %vm1396 = vcmp.lt.s32.totalorder %v464, 0
        %v1397 = vand.u32 %v464, 2139095040
        %v1398 = vshrl.u32 %v1397, 23
        %v1399 = vsub.s32 %v1398, 127
        %v1400 = vand.u32 2147483647, %v464
        %v1401 = vand.u32 %v1400, 8388607
        %v1402 = vor.u32 %v1401, 8388608
        %v1403 = vsub.s32 0, %v1402
        %v1404 = vadd.s32 %v1399, 1
        %vm1405 = vcmp.gt.s32.totalorder %v1404, 0
        %v1406 = vsel %vm1405, %v1404, 0
        %v1407 = vshrl.u32 %v1406, 5
        %v1408 = vand.u32 %v1406, 31
        %v1409 = vsub.s32 32, %v1408
        %v1410 = vshrl.u32 683565275, %v1409
        %v1411 = vshll.u32 683565275, %v1408
        %v1412 = vshrl.u32 2475754826, %v1409
        %v1413 = vor.u32 %v1411, %v1412
        %v1414 = vshll.u32 2475754826, %v1408
        %v1415 = vshrl.u32 2131351028, %v1409
        %v1416 = vor.u32 %v1414, %v1415
        %v1417 = vshll.u32 2131351028, %v1408
        %v1418 = vshrl.u32 2102212464, %v1409
        %v1419 = vor.u32 %v1417, %v1418
        %v1420 = vshll.u32 2102212464, %v1408
        %v1421 = vshrl.u32 920167782, %v1409
        %v1422 = vor.u32 %v1420, %v1421
        %v1423 = vshll.u32 920167782, %v1408
        %v1424 = vshrl.u32 1326507024, %v1409
        %v1425 = vor.u32 %v1423, %v1424
        %vm1426 = vcmp.lt.s32.totalorder %v1407, 1
        %vm1427 = vcmp.lt.s32.totalorder %v1407, 2
        %vm1428 = vcmp.lt.s32.totalorder %v1407, 3
        %vm1429 = vcmp.lt.s32.totalorder %v1407, 4
        %v1430 = vsel %vm1426, %v1410, %v1413
        %v1431 = vsel %vm1429, %v1419, 2102212464
        %v1432 = vsel %vm1428, %v1416, %v1431
        %v1433 = vsel %vm1427, %v1430, %v1432
        %v1434 = vsel %vm1426, %v1413, %v1416
        %v1435 = vsel %vm1429, %v1422, 920167782
        %v1436 = vsel %vm1428, %v1419, %v1435
        %v1437 = vsel %vm1427, %v1434, %v1436
        %v1438 = vsel %vm1426, %v1416, %v1419
        %v1439 = vsel %vm1429, %v1425, 1326507024
        %v1440 = vsel %vm1428, %v1422, %v1439
        %v1441 = vsel %vm1427, %v1438, %v1440
        %v1442 = vshll.u32 %v1402, 8
        %v1443 = vmul.u32.u64.compose %v1442, %v1441
        %v1444 = vextract.low.u32 %v1443
        %v1445 = vextract.high.u32 %v1443
        %v1446 = vmul.u32.u64.compose %v1442, %v1437
        %v1447 = vextract.low.u32 %v1446
        %v1448 = vextract.high.u32 %v1446
        %v1449 = vmul.u32 %v1442, %v1433
        %v1450 = vadd.s32 %v1445, %v1447
        %vm1451 = vc.u32 %v1445, %v1447
        %v1452 = vadd.s32 %v1448, 1
        %v1453 = vsel %vm1451, %v1452, %v1448
        %v1454 = vadd.s32 %v1449, %v1453
        %v1455 = vadd.s32 %v1454, 536870912
        %v1456 = vshrl.u32 %v1455, 30
        %v1457 = vshll.u32 %v1456, 30
        %v1458 = vsub.s32 %v1454, %v1457
        %vm1459 = vcmp.lt.s32.totalorder %v1458, 0
        %v1460 = vsub.s32 0, %v1458
        %v1461 = vsel %vm1459, %v1460, %v1458
        %v1462 = vclz %v1461
        %v1463 = vsub.s32 %v1462, 2
        %vm1464 = vcmp.gt.s32.totalorder 0, %v1463
        %v1465 = vsel %vm1464, 0, %v1463
        %v1466 = vsub.s32 32, %v1465
        %v1467 = vshll.u32 %v1458, %v1465
        %v1468 = vshrl.u32 %v1450, %v1466
        %v1469 = vor.u32 %v1467, %v1468
        %v1470 = vsub.s32 4294967266, %v1465
        %v1471 = vadd.s32 %v1470, 127
        %v1472 = vshll.u32 %v1471, 23
        %v1473 = vor.u32 4788187, %v1472
        %v1474 = vand.u32 2147483647, %v1473
        %v1476 = vcvt.s32.f32 %v1469
        %v1477 = vmul.f32 %v1476, %v1474
        %v1478 = vxor.u32 %v1477, 2147483648
        %v1479 = vsel %vm1396, %v1478, %v1477
        %v1480 = vsub.s32 4, %v1456
        %v1481 = vsel %vm1396, %v1480, %v1456
        %v1482 = vsel %vm1395, %v464, %v1479
        %v1483 = vsel %vm1395, 0, %v1481
        %v1484 = vcosq.f32.pop %v1482
        %v1485 = vsinq.f32.pop %v1482
        %vm1486 = vweird.f32 %v464
        %v1487 = vand.u32 %v1483, 3
        %vm1488 = vcmp.lt.s32.totalorder %v1487, 2
        %vm1489 = vcmp.eq.s32.totalorder %v1487, 0
        %v1490 = vxor.u32 %v1485, 2147483648
        %v1491 = vsel %vm1489, %v1484, %v1490
        %vm1492 = vcmp.eq.s32.totalorder %v1487, 2
        %v1493 = vxor.u32 %v1484, 2147483648
        %v1494 = vsel %vm1492, %v1493, %v1485
        %v1495 = vsel %vm1488, %v1491, %v1494
        %v1496 = vsel %vm1486, nan, %v1495
        %v1497 = vld [vmem:[#allocation2] sm:$0xff]
        %v1498 = vld [vmem:[#allocation2 + $0x8] sm:$0xff]
        %v1499 = vld [vmem:[#allocation2 + $0x10] sm:$0xff]
        %v1500 = vld [vmem:[#allocation2 + $0x18] sm:$0xff]
        %v1501 = vld [vmem:[#allocation2 + $0x20] sm:$0xff]
        %v1502 = vld [vmem:[#allocation2 + $0x28] sm:$0xff]
        %v1503 = vld [vmem:[#allocation2 + $0x30] sm:$0xff]
        %v1504 = vld [vmem:[#allocation2 + $0x38] sm:$0xff]
        %v1505 = vld [vmem:[#allocation2 + $0x40] sm:$0xff]
        %v1506 = vld [vmem:[#allocation2 + $0x48] sm:$0xff]
        %v1507 = vld [vmem:[%s277] sm:$0xff]
        %v1508 = vld [vmem:[%s277 + $0x8] sm:$0xff]
        %v1509 = vld [vmem:[%s277 + $0x10] sm:$0xff]
        %v1510 = vld [vmem:[%s277 + $0x18] sm:$0xff]
        %v1511 = vld [vmem:[%s277 + $0x20] sm:$0xff]
        %v1512 = vld [vmem:[%s277 + $0x28] sm:$0xff]
        %v1513 = vld [vmem:[%s277 + $0x30] sm:$0xff]
        %v1514 = vld [vmem:[%s277 + $0x38] sm:$0xff]
        %v1515 = vld [vmem:[%s277 + $0x40] sm:$0xff]
        %v1516 = vld [vmem:[%s277 + $0x48] sm:$0xff]
        %v1517 = vld [vmem:[%s277 + $0x50] sm:$0xff]
        %v1518 = vld [vmem:[%s277 + $0x58] sm:$0xff]
        %v1519 = vld [vmem:[%s277 + $0x60] sm:$0xff]
        %v1520 = vld [vmem:[%s277 + $0x68] sm:$0xff]
        %v1521 = vld [vmem:[%s277 + $0x70] sm:$0xff]
        %v1522 = vld [vmem:[%s277 + $0x78] sm:$0xff]
        %1523 = vmatprep.subr.mxu0 0.0
        %1524 = vmatpush1.msra.mxu0 %v1507
        %1525 = vmatprep.subr.mxu0 0.0
        %1526 = vmatpush1.msra.mxu0 %v1508
        %1527 = vmatprep.subr.mxu0 0.0
        %1528 = vmatpush1.msra.mxu0 %v1509
        %1529 = vmatprep.subr.mxu0 0.0
        %1530 = vmatpush1.msra.mxu0 %v1510
        %1531 = vmatprep.subr.mxu0 0.0
        %1532 = vmatpush1.msra.mxu0 %v1511
        %1533 = vmatprep.subr.mxu0 0.0
        %1534 = vmatpush1.msra.mxu0 %v1512
        %1535 = vmatprep.subr.mxu0 0.0
        %1536 = vmatpush1.msra.mxu0 %v1513
        %1537 = vmatprep.subr.mxu0 0.0
        %1538 = vmatpush1.msra.mxu0 %v1514
        %1539 = vmatprep.subr.mxu0 0.0
        %1540 = vmatpush1.msra.mxu0 %v1515
        %1541 = vmatprep.subr.mxu0 0.0
        %1542 = vmatpush1.msra.mxu0 %v1516
        %1543 = vmatprep.subr.mxu0 0.0
        %1544 = vmatpush1.msra.mxu0 %v1517
        %1545 = vmatprep.subr.mxu0 0.0
        %1546 = vmatpush1.msra.mxu0 %v1518
        %1547 = vmatprep.subr.mxu0 0.0
        %1548 = vmatpush1.msra.mxu0 %v1519
        %1549 = vmatprep.subr.mxu0 0.0
        %1550 = vmatpush1.msra.mxu0 %v1520
        %1551 = vmatprep.subr.mxu0 0.0
        %1552 = vmatpush1.msra.mxu0 %v1521
        %1553 = vmatprep.subr.mxu0 0.0
        %1554 = vmatpush1.msra.mxu0 %v1522
        %1555 = vmatprep.subr.mxu0 0.0
        %1556 = vmatpush1.msra.mxu0 0.0
        %1557 = vmatprep.subr.mxu0 0.0
        %1558 = vmatpush1.msra.mxu0 0.0
        %1559 = vmatprep.subr.mxu0 0.0
        %1560 = vmatpush1.msra.mxu0 0.0
        %1561 = vmatprep.subr.mxu0 0.0
        %1562 = vmatpush1.msra.mxu0 0.0
        %1563 = vmatprep.subr.mxu0 0.0
        %1564 = vmatpush1.msra.mxu0 0.0
        %1565 = vmatprep.subr.mxu0 0.0
        %1566 = vmatpush1.msra.mxu0 0.0
        %1567 = vmatprep.subr.mxu0 0.0
        %1568 = vmatpush1.msra.mxu0 0.0
        %1569 = vmatprep.subr.mxu0 0.0
        %1570 = vmatpush1.msra.mxu0 0.0
        %1571 = vmatprep.subr.mxu0 0.0
        %1572 = vmatpush1.msra.mxu0 0.0
        %1573 = vmatprep.subr.mxu0 0.0
        %1574 = vmatpush1.msra.mxu0 0.0
        %1575 = vmatprep.subr.mxu0 0.0
        %1576 = vmatpush1.msra.mxu0 0.0
        %1577 = vmatprep.subr.mxu0 0.0
        %1578 = vmatpush1.msra.mxu0 0.0
        %1579 = vmatprep.subr.mxu0 0.0
        %1580 = vmatpush1.msra.mxu0 0.0
        %1581 = vmatprep.subr.mxu0 0.0
        %1582 = vmatpush1.msra.mxu0 0.0
        %1583 = vmatprep.subr.mxu0 0.0
        %1584 = vmatpush1.msra.mxu0 0.0
        %1585 = vmatprep.subr.mxu0 0.0
        %1586 = vmatpush1.msra.mxu0 0.0
        %1587 = vmatprep.mubr.f32.mxu0 0.0
        %1588 = vmatmul.mubr.f32.gmra.mrb[0].mxu0 %v569
        %v1589 = vpop.f32.mrb[0].mxu0
        %v1590 = vadd.f32 0.0, %v1589
        %v1591 = vpop.f32.mrb[0].mxu0
        %1592 = vmatprep.mubr.f32.mxu0 0.0
        %1593 = vmatmul.mubr.f32.gmra.mrb[0].mxu0 %v672
        %v1594 = vpop.f32.mrb[0].mxu0
        %v1595 = vadd.f32 0.0, %v1594
        %v1596 = vpop.f32.mrb[0].mxu0
        %1597 = vmatprep.mubr.f32.mxu0 0.0
        %1598 = vmatmul.mubr.f32.gmra.mrb[0].mxu0 %v775
        %v1599 = vpop.f32.mrb[0].mxu0
        %v1600 = vadd.f32 0.0, %v1599
        %v1601 = vpop.f32.mrb[0].mxu0
        %1602 = vmatprep.mubr.f32.mxu0 0.0
        %1603 = vmatmul.mubr.f32.gmra.mrb[0].mxu0 %v878
        %v1604 = vpop.f32.mrb[0].mxu0
        %v1605 = vadd.f32 0.0, %v1604
        %v1606 = vpop.f32.mrb[0].mxu0
        %1607 = vmatprep.mubr.f32.mxu0 0.0
        %1608 = vmatmul.mubr.f32.gmra.mrb[0].mxu0 %v981
        %v1609 = vpop.f32.mrb[0].mxu0
        %v1610 = vadd.f32 0.0, %v1609
        %v1611 = vpop.f32.mrb[0].mxu0
        %1612 = vmatprep.mubr.f32.mxu0 0.0
        %1613 = vmatmul.mubr.f32.gmra.mrb[0].mxu0 %v1084
        %v1614 = vpop.f32.mrb[0].mxu0
        %v1615 = vadd.f32 0.0, %v1614
        %v1616 = vpop.f32.mrb[0].mxu0
        %1617 = vmatprep.mubr.f32.mxu0 0.0
        %1618 = vmatmul.mubr.f32.gmra.mrb[0].mxu0 %v1187
        %v1619 = vpop.f32.mrb[0].mxu0
        %v1620 = vadd.f32 0.0, %v1619
        %v1621 = vpop.f32.mrb[0].mxu0
        %1622 = vmatprep.mubr.f32.mxu0 0.0
        %1623 = vmatmul.mubr.f32.gmra.mrb[0].mxu0 %v1290
        %v1624 = vpop.f32.mrb[0].mxu0
        %v1625 = vadd.f32 0.0, %v1624
        %v1626 = vpop.f32.mrb[0].mxu0
        %1627 = vmatprep.mubr.f32.mxu0 0.0
        %1628 = vmatmul.mubr.f32.gmra.mrb[0].mxu0 %v1393
        %v1629 = vpop.f32.mrb[0].mxu0
        %v1630 = vadd.f32 0.0, %v1629
        %v1631 = vpop.f32.mrb[0].mxu0
        %1632 = vmatprep.mubr.f32.mxu0 0.0
        %1633 = vmatmul.mubr.f32.gmra.mrb[0].mxu0 %v1496
        %v1634 = vpop.f32.mrb[0].mxu0
        %v1635 = vadd.f32 0.0, %v1634
        %v1636 = vpop.f32.mrb[0].mxu0
        %1637 = vdwg.mxu0
        %v1638 = vadd.f32 %v1497, %v1590
        %v1639 = vadd.f32 %v1498, %v1595
        %v1640 = vadd.f32 %v1499, %v1600
        %v1641 = vadd.f32 %v1500, %v1605
        %v1642 = vadd.f32 %v1501, %v1610
        %v1643 = vadd.f32 %v1502, %v1615
        %v1644 = vadd.f32 %v1503, %v1620
        %v1645 = vadd.f32 %v1504, %v1625
        %v1646 = vadd.f32 %v1505, %v1630
        %v1647 = vadd.f32 %v1506, %v1635
        %1648 = vst.msk [vmem:[#allocation2] sm:$0xff] %vm317, %v1638
        %1649 = vst.msk [vmem:[#allocation2 + $0x8] sm:$0xff] %vm317, %v1639
        %1650 = vst.msk [vmem:[#allocation2 + $0x10] sm:$0xff] %vm317, %v1640
        %1651 = vst.msk [vmem:[#allocation2 + $0x18] sm:$0xff] %vm317, %v1641
        %1652 = vst.msk [vmem:[#allocation2 + $0x20] sm:$0xff] %vm317, %v1642
        %1653 = vst.msk [vmem:[#allocation2 + $0x28] sm:$0xff] %vm317, %v1643
        %1654 = vst.msk [vmem:[#allocation2 + $0x30] sm:$0xff] %vm317, %v1644
        %1655 = vst.msk [vmem:[#allocation2 + $0x38] sm:$0xff] %vm317, %v1645
        %1656 = vst.msk [vmem:[#allocation2 + $0x40] sm:$0xff] %vm317, %v1646
        %1657 = vst.msk [vmem:[#allocation2 + $0x48] sm:$0xff] %vm317, %v1647
        // Predicated region
        $region41: #{tpu_custom_call.1} parent=35 // pred_check
          %p1658 = pneg %p284
        $region42: #{tpu_custom_call.1} parent=35 // pred_check_branch
          %1660 = sbr.rel (%p1658) target = $region44
        $region43: #{tpu_custom_call.1} parent=35 // pred_region
          %v1661 = vld [vmem:[#allocation2] sm:$0xff]
          %v1662 = vld [vmem:[#allocation2 + $0x8] sm:$0xff]
          %v1663 = vld [vmem:[#allocation2 + $0x10] sm:$0xff]
          %v1664 = vld [vmem:[#allocation2 + $0x18] sm:$0xff]
          %v1665 = vld [vmem:[#allocation2 + $0x20] sm:$0xff]
          %v1666 = vld [vmem:[#allocation2 + $0x28] sm:$0xff]
          %v1667 = vld [vmem:[#allocation2 + $0x30] sm:$0xff]
          %v1668 = vld [vmem:[#allocation2 + $0x38] sm:$0xff]
          %v1669 = vld [vmem:[#allocation2 + $0x40] sm:$0xff]
          %v1670 = vld [vmem:[#allocation2 + $0x48] sm:$0xff]
          %1671 = vst.msk [vmem:[%s251] sm:$0xff] %vm317, %v1661
          %1672 = vst.msk [vmem:[%s251 + $0x8] sm:$0xff] %vm317, %v1662
          %1673 = vst.msk [vmem:[%s251 + $0x10] sm:$0xff] %vm317, %v1663
          %1674 = vst.msk [vmem:[%s251 + $0x18] sm:$0xff] %vm317, %v1664
          %1675 = vst.msk [vmem:[%s251 + $0x20] sm:$0xff] %vm317, %v1665
          %1676 = vst.msk [vmem:[%s251 + $0x28] sm:$0xff] %vm317, %v1666
          %1677 = vst.msk [vmem:[%s251 + $0x30] sm:$0xff] %vm317, %v1667
          %1678 = vst.msk [vmem:[%s251 + $0x38] sm:$0xff] %vm317, %v1668
          %1679 = vst.msk [vmem:[%s251 + $0x40] sm:$0xff] %vm317, %v1669
          %1680 = vst.msk [vmem:[%s251 + $0x48] sm:$0xff] %vm317, %v1670
        $region44: #{tpu_custom_call.1} parent=35 // pred_fallthru
          _
        %s1681 = sand.u32 %s139, 1
        %s1682 = sand.u32 %s139, 1
        %s1683 = smul.addr %s1682, 80
        %s1684 = scalar_lea.vmem [#allocation3], %s1683
        // Predicated region
        $region45: #{tpu_custom_call.1} parent=35 // pred_check
          %p1685 = pneg %p149
        $region46: #{tpu_custom_call.1} parent=35 // pred_check_branch
          %1687 = sbr.rel (%p1685) target = $region48
        $region47: #{tpu_custom_call.1} parent=35 // pred_region
          %s1688 = smul.u32 10, %s19
          %s1689 = ssub.s32 38, %s1688
          %p1690 = scmp.lt.s32.totalorder %s1689, 10
          %s1691 = scalar_select %p1690, %s1689, 10
          %s1692 = smul.u32 128, %s1691
          %p1693 = scmp.ne.s32.totalorder 0, %s1692
          %s1694 = smul.addr %s1688, 8
          %s1695 = scalar_lea.vmem %s4, %s1694
          // Predicated region
          $region49: #{tpu_custom_call.1} parent=47 // pred_check
            %p1696 = pneg %p1693
          $region50: #{tpu_custom_call.1} parent=47 // pred_check_branch
            %1698 = sbr.rel (%p1696) target = $region52
          $region51: #{tpu_custom_call.1} parent=47 // pred_region
            // Predicated region
            $region53: #{tpu_custom_call.1} parent=51 // pred_check
              _
            $region54: #{tpu_custom_call.1} parent=51 // pred_check_branch
              %1700 = sbr.rel (0) target = $region56
            $region55: #{tpu_custom_call.1} parent=51 // pred_region
              // Predicated region
              $region75: #{tpu_custom_call.1} parent=55 // pred_check
                _
              $region76: #{tpu_custom_call.1} parent=55 // pred_check_branch
                %1768 = sbr.rel (0) target = $region78
              $region77: #{tpu_custom_call.1} parent=55 // pred_region
                %s1769 = sdiv.u32.pop %s1691, 10
                %s1770 = srem.u32.pop %s1691, 10
                // While loop
                $region79: #{tpu_custom_call.1} parent=77 // loop_pre_header
                  _
                $region80: #{tpu_custom_call.1} parent=77 // loop_header
                  %s1772 = sphi 0, %s1774
                  %p1773 = scmp.ge.s32.totalorder %s1772, %s1769
                  %s1777 = sphi 0, %s1802
                  %s1778 = sphi %s1684, %s1805
                  %s1779 = sphi %s1695, %s1806
                $region81: #{tpu_custom_call.1} parent=77 // loop_header_branch
                  %1776 = sbr.rel (%p1773) target = $region85
                $region82: #{tpu_custom_call.1} parent=77 // loop_body
                  %v1780 = vld [vmem:[%s1778] sm:$0xff]
                  %1781 = vst [vmem:[%s1779] sm:$0xff] %v1780
                  %v1782 = vld [vmem:[%s1778 + $0x8] sm:$0xff]
                  %1783 = vst [vmem:[%s1779 + $0x8] sm:$0xff] %v1782
                  %v1784 = vld [vmem:[%s1778 + $0x10] sm:$0xff]
                  %1785 = vst [vmem:[%s1779 + $0x10] sm:$0xff] %v1784
                  %v1786 = vld [vmem:[%s1778 + $0x18] sm:$0xff]
                  %1787 = vst [vmem:[%s1779 + $0x18] sm:$0xff] %v1786
                  %v1788 = vld [vmem:[%s1778 + $0x20] sm:$0xff]
                  %1789 = vst [vmem:[%s1779 + $0x20] sm:$0xff] %v1788
                  %v1790 = vld [vmem:[%s1778 + $0x28] sm:$0xff]
                  %1791 = vst [vmem:[%s1779 + $0x28] sm:$0xff] %v1790
                  %v1792 = vld [vmem:[%s1778 + $0x30] sm:$0xff]
                  %1793 = vst [vmem:[%s1779 + $0x30] sm:$0xff] %v1792
                  %v1794 = vld [vmem:[%s1778 + $0x38] sm:$0xff]
                  %1795 = vst [vmem:[%s1779 + $0x38] sm:$0xff] %v1794
                  %v1796 = vld [vmem:[%s1778 + $0x40] sm:$0xff]
                  %1797 = vst [vmem:[%s1779 + $0x40] sm:$0xff] %v1796
                  %v1798 = vld [vmem:[%s1778 + $0x48] sm:$0xff]
                  %1799 = vst [vmem:[%s1779 + $0x48] sm:$0xff] %v1798
                  %s1800 = sadd.s32 1, %s1777
                  %p1801 = scmp.ge.s32.totalorder %s1800, %s1769
                  %s1802 = scalar_select %p1801, 0, %s1800
                  %s1803 = smul.u32 %s1802, 80
                  %s1804 = smul.u32 %s1802, 80
                  %s1805 = scalar_lea.vmem %s1684, %s1803 [#allocation3]
                  %s1806 = scalar_lea.vmem %s1695, %s1804
                $region83: #{tpu_custom_call.1} parent=77 // loop_footer
                  %s1774 = sadd.s32 %s1772, 1
                $region84: #{tpu_custom_call.1} parent=77 // loop_footer_branch
                  %1771 = sbr.rel target = $region80
                $region85: #{tpu_custom_call.1} parent=77 // loop_exit
                  _
                %s1807 = sdiv.u32.pop %s1691, 10
                %s1808 = srem.u32.pop %s1691, 10
                %s1809 = smul.u32 %s1807, 10
                %s1810 = smul.u32 8, %s1809
                %s1811 = scalar_lea.vmem %s1684, %s1810 [#allocation3]
                %s1812 = smul.u32 8, %s1809
                %s1813 = scalar_lea.vmem %s1695, %s1812
                // While loop
                $region86: #{tpu_custom_call.1} parent=77 // loop_pre_header
                  _
                $region87: #{tpu_custom_call.1} parent=77 // loop_header
                  %s1815 = sphi 0, %s1817
                  %p1816 = scmp.ge.s32.totalorder %s1815, %s1808
                  %s1820 = sphi 0, %s1827
                  %s1821 = sphi %s1811, %s1830
                  %s1822 = sphi %s1813, %s1831
                $region88: #{tpu_custom_call.1} parent=77 // loop_header_branch
                  %1819 = sbr.rel (%p1816) target = $region92
                $region89: #{tpu_custom_call.1} parent=77 // loop_body
                  %v1823 = vld [vmem:[%s1821] sm:$0xff]
                  %1824 = vst [vmem:[%s1822] sm:$0xff] %v1823
                  %s1825 = sadd.s32 1, %s1820
                  %p1826 = scmp.ge.s32.totalorder %s1825, %s1808
                  %s1827 = scalar_select %p1826, 0, %s1825
                  %s1828 = smul.u32 %s1827, 8
                  %s1829 = smul.u32 %s1827, 8
                  %s1830 = scalar_lea.vmem %s1811, %s1828 [#allocation3]
                  %s1831 = scalar_lea.vmem %s1813, %s1829
                $region90: #{tpu_custom_call.1} parent=77 // loop_footer
                  %s1817 = sadd.s32 %s1815, 1
                $region91: #{tpu_custom_call.1} parent=77 // loop_footer_branch
                  %1814 = sbr.rel target = $region87
                $region92: #{tpu_custom_call.1} parent=77 // loop_exit
                  _
              $region78: #{tpu_custom_call.1} parent=55 // pred_fallthru
                _
              // Predicated region
              $region93: #{tpu_custom_call.1} parent=55 // pred_check
                _
              $region94: #{tpu_custom_call.1} parent=55 // pred_check_branch
                %1833 = sbr.rel target = $region96
              $region95: #{tpu_custom_call.1} parent=55 // pred_region
                _
              $region96: #{tpu_custom_call.1} parent=55 // pred_fallthru
                _
            $region56: #{tpu_custom_call.1} parent=51 // pred_fallthru
              _
            // Predicated region
            $region57: #{tpu_custom_call.1} parent=51 // pred_check
              _
            $region58: #{tpu_custom_call.1} parent=51 // pred_check_branch
              %1702 = sbr.rel target = $region60
            $region59: #{tpu_custom_call.1} parent=51 // pred_region
              %s1704 = sdiv.u32.pop %s1691, 10
              %s1705 = srem.u32.pop %s1691, 10
              // While loop
              $region61: #{tpu_custom_call.1} parent=59 // loop_pre_header
                _
              $region62: #{tpu_custom_call.1} parent=59 // loop_header
                %s1707 = sphi 0, %s1709
                %p1708 = scmp.ge.s32.totalorder %s1707, %s1704
                %s1712 = sphi 0, %s1737
                %s1713 = sphi %s1684, %s1740
                %s1714 = sphi %s1695, %s1741
              $region63: #{tpu_custom_call.1} parent=59 // loop_header_branch
                %1711 = sbr.rel (%p1708) target = $region67
              $region64: #{tpu_custom_call.1} parent=59 // loop_body
                %v1715 = vld [vmem:[%s1713] sm:$0xff]
                %1716 = vst [vmem:[%s1714] sm:$0xff] %v1715
                %v1717 = vld [vmem:[%s1713 + $0x8] sm:$0xff]
                %1718 = vst [vmem:[%s1714 + $0x8] sm:$0xff] %v1717
                %v1719 = vld [vmem:[%s1713 + $0x10] sm:$0xff]
                %1720 = vst [vmem:[%s1714 + $0x10] sm:$0xff] %v1719
                %v1721 = vld [vmem:[%s1713 + $0x18] sm:$0xff]
                %1722 = vst [vmem:[%s1714 + $0x18] sm:$0xff] %v1721
                %v1723 = vld [vmem:[%s1713 + $0x20] sm:$0xff]
                %1724 = vst [vmem:[%s1714 + $0x20] sm:$0xff] %v1723
                %v1725 = vld [vmem:[%s1713 + $0x28] sm:$0xff]
                %1726 = vst [vmem:[%s1714 + $0x28] sm:$0xff] %v1725
                %v1727 = vld [vmem:[%s1713 + $0x30] sm:$0xff]
                %1728 = vst [vmem:[%s1714 + $0x30] sm:$0xff] %v1727
                %v1729 = vld [vmem:[%s1713 + $0x38] sm:$0xff]
                %1730 = vst [vmem:[%s1714 + $0x38] sm:$0xff] %v1729
                %v1731 = vld [vmem:[%s1713 + $0x40] sm:$0xff]
                %1732 = vst [vmem:[%s1714 + $0x40] sm:$0xff] %v1731
                %v1733 = vld [vmem:[%s1713 + $0x48] sm:$0xff]
                %1734 = vst [vmem:[%s1714 + $0x48] sm:$0xff] %v1733
                %s1735 = sadd.s32 1, %s1712
                %p1736 = scmp.ge.s32.totalorder %s1735, %s1704
                %s1737 = scalar_select %p1736, 0, %s1735
                %s1738 = smul.u32 %s1737, 80
                %s1739 = smul.u32 %s1737, 80
                %s1740 = scalar_lea.vmem %s1684, %s1738 [#allocation3]
                %s1741 = scalar_lea.vmem %s1695, %s1739
              $region65: #{tpu_custom_call.1} parent=59 // loop_footer
                %s1709 = sadd.s32 %s1707, 1
              $region66: #{tpu_custom_call.1} parent=59 // loop_footer_branch
                %1706 = sbr.rel target = $region62
              $region67: #{tpu_custom_call.1} parent=59 // loop_exit
                _
              %s1742 = sdiv.u32.pop %s1691, 10
              %s1743 = srem.u32.pop %s1691, 10
              %s1744 = smul.u32 %s1742, 10
              %s1745 = smul.u32 8, %s1744
              %s1746 = scalar_lea.vmem %s1684, %s1745 [#allocation3]
              %s1747 = smul.u32 8, %s1744
              %s1748 = scalar_lea.vmem %s1695, %s1747
              // While loop
              $region68: #{tpu_custom_call.1} parent=59 // loop_pre_header
                _
              $region69: #{tpu_custom_call.1} parent=59 // loop_header
                %s1750 = sphi 0, %s1752
                %p1751 = scmp.ge.s32.totalorder %s1750, %s1743
                %s1755 = sphi 0, %s1762
                %s1756 = sphi %s1746, %s1765
                %s1757 = sphi %s1748, %s1766
              $region70: #{tpu_custom_call.1} parent=59 // loop_header_branch
                %1754 = sbr.rel (%p1751) target = $region74
              $region71: #{tpu_custom_call.1} parent=59 // loop_body
                %v1758 = vld [vmem:[%s1756] sm:$0xff]
                %1759 = vst [vmem:[%s1757] sm:$0xff] %v1758
                %s1760 = sadd.s32 1, %s1755
                %p1761 = scmp.ge.s32.totalorder %s1760, %s1743
                %s1762 = scalar_select %p1761, 0, %s1760
                %s1763 = smul.u32 %s1762, 8
                %s1764 = smul.u32 %s1762, 8
                %s1765 = scalar_lea.vmem %s1746, %s1763 [#allocation3]
                %s1766 = scalar_lea.vmem %s1748, %s1764
              $region72: #{tpu_custom_call.1} parent=59 // loop_footer
                %s1752 = sadd.s32 %s1750, 1
              $region73: #{tpu_custom_call.1} parent=59 // loop_footer_branch
                %1749 = sbr.rel target = $region69
              $region74: #{tpu_custom_call.1} parent=59 // loop_exit
                _
            $region60: #{tpu_custom_call.1} parent=51 // pred_fallthru
              _
          $region52: #{tpu_custom_call.1} parent=47 // pred_fallthru
            _
          %1834 = vnop
        $region48: #{tpu_custom_call.1} parent=35 // pred_fallthru
          _
      $region36: #{tpu_custom_call.1} parent=5 // pred_fallthru
        _
      %p1835 = scmp.le.s32.totalorder 2, %s10
      // Predicated region
      $region97: #{tpu_custom_call.1} parent=5 // pred_check
        %p1836 = pneg %p1835
      $region98: #{tpu_custom_call.1} parent=5 // pred_check_branch
        %1838 = sbr.rel (%p1836) target = $region100
      $region99: #{tpu_custom_call.1} parent=5 // pred_region
        %s1839 = ssub.s32 %s10, 2
        // Predicated region
        $region101: #{tpu_custom_call.1} parent=99 // pred_check
          %p1840 = pneg %p155
        $region102: #{tpu_custom_call.1} parent=99 // pred_check_branch
          %1842 = sbr.rel (%p1840) target = $region104
        $region103: #{tpu_custom_call.1} parent=99 // pred_region
          %s1843 = sand.u32 %s140, 1
          %s1844 = sand.u32 %s140, 1
          %s1845 = smul.addr %s1844, 80
          %s1846 = scalar_lea.vmem [#allocation3], %s1845
        $region104: #{tpu_custom_call.1} parent=99 // pred_fallthru
          _
      $region100: #{tpu_custom_call.1} parent=5 // pred_fallthru
        _
    $region6: #{tpu_custom_call.1} parent=1 // loop_footer
      %s14 = sadd.s32 1, %s10
    $region7: #{tpu_custom_call.1} parent=1 // loop_footer_branch
      %9 = sbr.rel target = $region3
    $region8: #{tpu_custom_call.1} parent=1 // loop_exit
      _

</llo_original>
